<compile_context>
chip_gen: v7x
topology: tpu7x:2x2x1
jax: 0.10.0
libtpu: 0.0.40
codegen_flags: <defaults>
</compile_context>

<pallas_src>
import functools
import math

import jax
import jax.numpy as jnp
from jax import lax
from jax.experimental import pallas as pl
from jax.experimental.pallas import tpu as pltpu


def edge_transition_kernel(node_i_ref, node_j_ref, edge_ref,
                           w1e_ref, w1i_ref, w1j_ref, b1_ref,
                           w2_ref, b2_ref,
                           wf_ref, wfe_ref, wfi_ref, wfj_ref, bf_ref,
                           gamma_ref, beta_ref,
                           out_ref, *, d_out_true, slab_rows):
    ti = node_i_ref.shape[1]          # row tile
    tj = node_j_ref.shape[1]          # column tile
    e_in = edge_ref.shape[3]          # edge_embed_in (native dtype, cast below)
    hp = w2_ref.shape[0]              # padded hidden size
    dp = out_ref.shape[3]             # padded output size
    f32 = jnp.float32
    bf16 = jnp.bfloat16

    # Column-tile contributions — independent of the row slab, hoisted.
    node_j = node_j_ref[0]                                                   # (tj, C) bf16
    p1_j = jnp.dot(node_j, w1j_ref[...], preferred_element_type=f32)        # (tj, Hp)
    pf_j = jnp.dot(node_j, wfj_ref[...], preferred_element_type=f32)        # (tj, Dp)

    inv_d = 1.0 / float(d_out_true)

    def do_slab(r0, rows):
        m = rows * tj
        ni = node_i_ref[0, pl.ds(r0, rows), :]                               # (rows, C) bf16
        # In-kernel bf16 cast of the edge slab (native dtype fed from HBM).
        edge2 = edge_ref[0, pl.ds(r0, rows), :, :].reshape(m, e_in).astype(bf16)

        # ---- trunk layer 1: x @ W1 rank-factored (no concat, no bcast bufs)
        p1_i = jnp.dot(ni, w1i_ref[...], preferred_element_type=f32) + b1_ref[...]   # (rows, Hp)
        pre1 = jnp.dot(edge2, w1e_ref[...], preferred_element_type=f32)              # (m, Hp)
        pre1 = pre1.reshape(rows, tj, hp) + p1_i[:, None, :] + p1_j[None, :, :]
        h1 = jnp.maximum(pre1, 0.0).reshape(m, hp).astype(bf16)              # fused ReLU+cast

        # ---- trunk layer 2 (fused ReLU + bf16 cast, no extra f32 copies kept live)
        h2 = jnp.maximum(
            jnp.dot(h1, w2_ref[...], preferred_element_type=f32) + b2_ref[...],
            0.0).astype(bf16)                                                 # (m, Hp) bf16

        # ---- final_layer(trunk(x) + x): residual folded in via the row split
        pf_i = jnp.dot(ni, wfi_ref[...], preferred_element_type=f32) + bf_ref[...]   # (rows, Dp)
        y = (jnp.dot(h2, wf_ref[...], preferred_element_type=f32)
             + jnp.dot(edge2, wfe_ref[...], preferred_element_type=f32))             # (m, Dp)
        y = y.reshape(rows, tj, dp) + pf_i[:, None, :] + pf_j[None, :, :]

        # ---- single-pass LayerNorm over the TRUE channel count; padded
        # channels of y and gamma/beta are exactly 0 so they contribute 0 to
        # both moments and to the stored output.
        # (E[y^2]-mean^2 can cancel in f32 if |mean|>>std; clamped at 0.)
        s1 = jnp.sum(y, axis=-1, keepdims=True)
        s2 = jnp.sum(y * y, axis=-1, keepdims=True)
        mean = s1 * inv_d
        var = jnp.maximum(s2 * inv_d - mean * mean, 0.0)
        out = (y - mean) * lax.rsqrt(var + 1e-5) * gamma_ref[...] + beta_ref[...]
        out_ref[0, pl.ds(r0, rows), :, :] = out.astype(out_ref.dtype)

    num_slabs = ti // slab_rows
    if num_slabs <= 1:
        do_slab(0, ti)
    else:
        def body(s, carry):
            do_slab(pl.multiple_of(s * slab_rows, slab_rows), slab_rows)
            return carry
        lax.fori_loop(0, num_slabs, body, 0, unroll=False)


def _round_up(x, m):
    return (x + m - 1) // m * m


def _vmem_capacity_bytes():
    """Physical VMEM of the attached TPU generation; conservative fallback."""
    try:
        info = pltpu.get_tpu_info()
        cap = getattr(info, "vmem_capacity_bytes", None)
        if cap:
            return int(cap)
    except Exception:
        pass
    return 64 * 1024 * 1024          # assume v7x-sized VMEM if the query fails


def _vmem_estimate(ti, tj, slab_rows, e_in, c, hp, dp, edge_bytes):
    """Per-step VMEM footprint (bytes), modelling real lane/sublane padding."""
    tj8 = _round_up(tj, 8)
    e_lanes = _round_up(e_in, 128)
    c_lanes = _round_up(c, 128)
    # Double-buffered pipeline blocks (VMEM layout: last dim -> 128 lanes,
    # second-to-last -> 8 sublanes).
    edge_blk = ti * tj8 * e_lanes * edge_bytes
    out_blk = ti * tj8 * dp * 4
    node_blk = (_round_up(ti, 16) + _round_up(tj, 16)) * c_lanes * 2
    blocks = 2 * (edge_blk + out_blk + node_blk)
    # Weights (bf16) + bias / LN rows (f32), double-buffered.
    split_rows = _round_up(e_in, 16) + 2 * _round_up(c, 16)
    weights = 2 * (split_rows * hp * 2          # W1 splits
                   + _round_up(hp, 16) * hp * 2  # W2
                   + _round_up(hp, 16) * dp * 2  # Wf (full)
                   + split_rows * dp * 2         # Wf splits
                   + 8 * (2 * hp + 3 * dp) * 4)  # b1,b2,bf,gamma,beta
    # Live intermediates, bounded by the slab (bf16 h1/h2, f32 accum/epilogue).
    m_s = slab_rows * tj
    inter = m_s * (2 * e_lanes + 10 * hp + 8 * dp)
    return blocks + weights + inter


def _pick_slab_rows(tile_i, tile_j, m_slab_target):
    """Largest multiple-of-8 divisor of tile_i keeping slab M near target."""
    if tile_i % 8 != 0:
        return tile_i
    rows = min(tile_i, max(8, (m_slab_target // max(tile_j, 1)) // 8 * 8))
    while tile_i % rows != 0:
        rows -= 8
    return max(rows, 8)


def _pick_tiles(n, e_in, c, hp, dp, edge_bytes, budget, m_slab_target):
    """Largest (tile_i, tile_j) pair (multiples of 8 dividing n) under budget."""
    cands = [d for d in (512, 256, 128, 64, 32, 16, 8) if d <= n and n % d == 0]
    if not cands:
        cands = [n]                    # tiny / awkward sequences: single full tile
    best, best_m = (cands[-1], cands[-1]), -1
    for t_i in cands:
        for t_j in cands:
            sr = _pick_slab_rows(t_i, t_j, m_slab_target)
            if (_vmem_estimate(t_i, t_j, sr, e_in, c, hp, dp, edge_bytes) <= budget
                    and t_i * t_j > best_m):
                best, best_m = (t_i, t_j), t_i * t_j
    return best


def edge_transition_2d(node_embed, edge_embed, params, *,
                       tile_i=None, tile_j=None, slab_rows=None,
                       out_dtype=jnp.float32):
    """fwd_2d path of EdgeTransition. Returns (B, N, N, edge_embed_out)."""
    B, N, _ = node_embed.shape
    E_in = edge_embed.shape[-1]
    C = params['w_init'].shape[1]
    H = E_in + 2 * C
    D_out = params['wf'].shape[1]
    Hp = _round_up(H, 128)        # lane-pad hidden dim (no-op at production sizes)
    Dp = _round_up(D_out, 128)    # lane-pad output dim -> unmasked lane-dense stores
    bf16 = jnp.bfloat16

    # initial_embed linear — cheap per-node glue, plain JAX (cast fuses into GEMM).
    node_c = (node_embed @ params['w_init'] + params['b_init']).astype(bf16)   # (B,N,C)

    def pad2(a, rows, cols):
        return jnp.pad(a, ((0, rows - a.shape[0]), (0, cols - a.shape[1]))).astype(bf16)

    def pad_row(a, cols):
        a = jnp.asarray(a, jnp.float32).reshape(1, -1)
        return jnp.pad(a, ((0, 0), (0, cols - a.shape[1])))

    w1, w2, wf = params['w1'], params['w2'], params['wf']
    # Row-split of W1 / Wf into the [edge, node_i, node_j] contributions.
    w1e = pad2(w1[:E_in], E_in, Hp)
    w1i = pad2(w1[E_in:E_in + C], C, Hp)
    w1j = pad2(w1[E_in + C:], C, Hp)
    w2p = pad2(w2, Hp, Hp)
    wfp = pad2(wf, Hp, Dp)
    wfe = pad2(wf[:E_in], E_in, Dp)
    wfi = pad2(wf[E_in:E_in + C], C, Dp)
    wfj = pad2(wf[E_in + C:], C, Dp)
    b1p = pad_row(params['b1'], Hp)
    b2p = pad_row(params['b2'], Hp)
    bfp = pad_row(params['bf'], Dp)
    gp = pad_row(params['gamma'], Dp)
    bp = pad_row(params['beta'], Dp)

    edge_bytes = edge_embed.dtype.itemsize

    # Generation-aware VMEM budgeting.
    MiB = 1024 * 1024
    cap = _vmem_capacity_bytes()
    if cap >= 96 * MiB:          # v5e / v6e: 128 MiB physical VMEM
        budget, limit_hi, m_slab_target = 80 * MiB, 96 * MiB, 4096
    else:                        # v7x: 64 MiB physical VMEM
        budget, limit_hi, m_slab_target = 28 * MiB, 48 * MiB, 2048

    if tile_i is None or tile_j is None:
        auto_i, auto_j = _pick_tiles(N, E_in, C, Hp, Dp, edge_bytes, budget,
                                     m_slab_target)
        tile_i = auto_i if tile_i is None else tile_i
        tile_j = auto_j if tile_j is None else tile_j
    assert N % tile_i == 0 and N % tile_j == 0, (N, tile_i, tile_j)

    if slab_rows is None:
        slab_rows = _pick_slab_rows(tile_i, tile_j, m_slab_target)
    if tile_i % slab_rows != 0:
        slab_rows = tile_i

    est = _vmem_estimate(tile_i, tile_j, slab_rows, E_in, C, Hp, Dp, edge_bytes)
    vmem_limit = int(min(max(est * 3 // 2, 32 * MiB), limit_hi))

    # Largest parallel axis first so v7x's 2 TensorCores get balanced halves.
    grid = (N // tile_i, N // tile_j, B)
    kernel = functools.partial(edge_transition_kernel,
                               d_out_true=D_out, slab_rows=slab_rows)

    out_padded = pl.pallas_call(
        kernel,
        out_shape=jax.ShapeDtypeStruct((B, N, N, Dp), out_dtype),
        grid=grid,
        in_specs=[
            pl.BlockSpec((1, tile_i, C), lambda i, j, b: (b, i, 0)),             # node rows i
            pl.BlockSpec((1, tile_j, C), lambda i, j, b: (b, j, 0)),             # node cols j
            pl.BlockSpec((1, tile_i, tile_j, E_in), lambda i, j, b: (b, i, j, 0)),
            pl.BlockSpec((E_in, Hp), lambda i, j, b: (0, 0)),   # W1[:E_in]
            pl.BlockSpec((C, Hp), lambda i, j, b: (0, 0)),      # W1[E_in:E_in+C]
            pl.BlockSpec((C, Hp), lambda i, j, b: (0, 0)),      # W1[E_in+C:]
            pl.BlockSpec((1, Hp), lambda i, j, b: (0, 0)),      # b1
            pl.BlockSpec((Hp, Hp), lambda i, j, b: (0, 0)),     # W2
            pl.BlockSpec((1, Hp), lambda i, j, b: (0, 0)),      # b2
            pl.BlockSpec((Hp, Dp), lambda i, j, b: (0, 0)),     # Wf (full, for h2)
            pl.BlockSpec((E_in, Dp), lambda i, j, b: (0, 0)),   # Wf[:E_in]
            pl.BlockSpec((C, Dp), lambda i, j, b: (0, 0)),      # Wf[E_in:E_in+C]
            pl.BlockSpec((C, Dp), lambda i, j, b: (0, 0)),      # Wf[E_in+C:]
            pl.BlockSpec((1, Dp), lambda i, j, b: (0, 0)),      # bf
            pl.BlockSpec((1, Dp), lambda i, j, b: (0, 0)),      # ln gamma
            pl.BlockSpec((1, Dp), lambda i, j, b: (0, 0)),      # ln beta
        ],
        out_specs=pl.BlockSpec((1, tile_i, tile_j, Dp), lambda i, j, b: (b, i, j, 0)),
        compiler_params=pltpu.CompilerParams(
            dimension_semantics=("parallel", "parallel", "parallel"),
            vmem_limit_bytes=vmem_limit),
    )(node_c, node_c, edge_embed,
      w1e, w1i, w1j, b1p, w2p, b2p,
      wfp, wfe, wfi, wfj, bfp, gp, bp)

    if Dp != D_out:
        out_padded = out_padded[..., :D_out]
    return out_padded


def reference_2d(node_embed, edge_embed, p):
    """Pure-JAX f32 reference mirroring the PyTorch fwd_2d exactly."""
    node_c = node_embed @ p['w_init'] + p['b_init']
    B, N, C = node_c.shape
    bias_i = jnp.tile(node_c[:, :, None, :], (1, 1, N, 1))
    bias_j = jnp.tile(node_c[:, None, :, :], (1, N, 1, 1))
    x = jnp.concatenate([edge_embed, bias_i, bias_j], axis=-1)
    h = jnp.maximum(x @ p['w1'] + p['b1'][0], 0.0)
    h = jnp.maximum(h @ p['w2'] + p['b2'][0], 0.0)
    h = h + x
    y = h @ p['wf'] + p['bf'][0]
    mu = y.mean(-1, keepdims=True)
    var = ((y - mu) ** 2).mean(-1, keepdims=True)
    y_n = (y - mu) / jnp.sqrt(var + 1e-5)
    return y_n * p['gamma'][0] + p['beta'][0]


def _make_params(key, node_embed_size, edge_embed_in, edge_embed_out, node_dilation):
    C = node_embed_size // node_dilation
    H = 2 * C + edge_embed_in
    keys = jax.random.split(key, 8)

    def rnd(k, shape, scale):
        return (scale * jax.random.normal(k, shape)).astype(jnp.float32)

    return {
        'w_init': rnd(keys[0], (node_embed_size, C), math.sqrt(2.0 / node_embed_size)),
        'b_init': jnp.zeros((C,), jnp.float32),
        'w1': rnd(keys[1], (H, H), math.sqrt(2.0 / H)),
        'b1': rnd(keys[2], (1, H), 0.1),
        'w2': rnd(keys[3], (H, H), math.sqrt(2.0 / H)),
        'b2': rnd(keys[4], (1, H), 0.1),
        'wf': rnd(keys[5], (H, edge_embed_out), 0.02),
        'bf': rnd(keys[6], (1, edge_embed_out), 0.02),
        'gamma': jnp.ones((1, edge_embed_out), jnp.float32),
        'beta': jnp.zeros((1, edge_embed_out), jnp.float32),
    }


if __name__ == "__main__":
    # Module hyperparams (mode='2d')
    node_embed_size = 32
    edge_embed_in = 8
    edge_embed_out = 16
    node_dilation = 2

    key = jax.random.PRNGKey(0)
    k_par, k_n1, k_e1, k_n2, k_e2 = jax.random.split(key, 5)
    params = _make_params(k_par, node_embed_size, edge_embed_in, edge_embed_out,
                          node_dilation)

    def rnd(k, shape):
        return jax.random.normal(k, shape).astype(jnp.float32)

    # Test 1: small shapes, auto tiles (single slab path).
    B1, N1 = 2, 8
    node1 = rnd(k_n1, (B1, N1, node_embed_size))
    edge1 = rnd(k_e1, (B1, N1, N1, edge_embed_in))
    out1 = jax.block_until_ready(edge_transition_2d(node1, edge1, params))
    ref1 = reference_2d(node1, edge1, params)
    assert out1.shape == (B1, N1, N1, edge_embed_out), out1.shape
    assert jnp.allclose(out1, ref1, atol=3e-2, rtol=3e-2), \
        float(jnp.max(jnp.abs(out1 - ref1)))

    # Test 2: forced tiles + row-slab loop (exercises the in-kernel fori_loop
    # and multi-tile grid that production / v7x configurations use).
    B2, N2 = 2, 32
    node2 = rnd(k_n2, (B2, N2, node_embed_size))
    edge2 = rnd(k_e2, (B2, N2, N2, edge_embed_in))
    out2 = jax.block_until_ready(
        edge_transition_2d(node2, edge2, params, tile_i=16, tile_j=16, slab_rows=8))
    ref2 = reference_2d(node2, edge2, params)
    assert out2.shape == (B2, N2, N2, edge_embed_out), out2.shape
    assert jnp.allclose(out2, ref2, atol=3e-2, rtol=3e-2), \
        float(jnp.max(jnp.abs(out2 - ref2)))

    print("KERNEL_OK")
</pallas_src>

<mosaic_0001>
module attributes {stable_mosaic.version = 11 : i64} {
  func.func @edge_transition_kernel(%arg0: i32, %arg1: i32, %arg2: i32, %arg3: memref<1x8x16xbf16, #tpu.memory_space<vmem>>, %arg4: memref<1x8x16xbf16, #tpu.memory_space<vmem>>, %arg5: memref<1x8x8x8xf32, #tpu.memory_space<vmem>>, %arg6: memref<8x128xbf16, #tpu.memory_space<vmem>>, %arg7: memref<16x128xbf16, #tpu.memory_space<vmem>>, %arg8: memref<16x128xbf16, #tpu.memory_space<vmem>>, %arg9: memref<1x128xf32, #tpu.memory_space<vmem>>, %arg10: memref<128x128xbf16, #tpu.memory_space<vmem>>, %arg11: memref<1x128xf32, #tpu.memory_space<vmem>>, %arg12: memref<128x128xbf16, #tpu.memory_space<vmem>>, %arg13: memref<8x128xbf16, #tpu.memory_space<vmem>>, %arg14: memref<16x128xbf16, #tpu.memory_space<vmem>>, %arg15: memref<16x128xbf16, #tpu.memory_space<vmem>>, %arg16: memref<1x128xf32, #tpu.memory_space<vmem>>, %arg17: memref<1x128xf32, #tpu.memory_space<vmem>>, %arg18: memref<1x128xf32, #tpu.memory_space<vmem>>, %arg19: memref<1x8x8x128xf32, #tpu.memory_space<vmem>>) attributes {dimension_semantics = [#tpu.dimension_semantics<parallel>, #tpu.dimension_semantics<parallel>, #tpu.dimension_semantics<parallel>], iteration_bounds = array<i64: 1, 1, 2>, scalar_prefetch = 0 : i64, scratch_operands = 0 : i64, tpu.core_type = #tpu.core_type<tc>, window_params = [{transform_indices = @transform_0, window_bounds = array<i64: 1, 8, 16>}, {transform_indices = @transform_1, window_bounds = array<i64: 1, 8, 16>}, {transform_indices = @transform_2, window_bounds = array<i64: 1, 8, 8, 8>}, {pipeline_mode = #tpu.pipeline_mode<synchronous>, transform_indices = @transform_3, window_bounds = array<i64: 8, 128>}, {pipeline_mode = #tpu.pipeline_mode<synchronous>, transform_indices = @transform_4, window_bounds = array<i64: 16, 128>}, {pipeline_mode = #tpu.pipeline_mode<synchronous>, transform_indices = @transform_5, window_bounds = array<i64: 16, 128>}, {pipeline_mode = #tpu.pipeline_mode<synchronous>, transform_indices = @transform_6, window_bounds = array<i64: 1, 128>}, {pipeline_mode = #tpu.pipeline_mode<synchronous>, transform_indices = @transform_7, window_bounds = array<i64: 128, 128>}, {pipeline_mode = #tpu.pipeline_mode<synchronous>, transform_indices = @transform_8, window_bounds = array<i64: 1, 128>}, {pipeline_mode = #tpu.pipeline_mode<synchronous>, transform_indices = @transform_9, window_bounds = array<i64: 128, 128>}, {pipeline_mode = #tpu.pipeline_mode<synchronous>, transform_indices = @transform_10, window_bounds = array<i64: 8, 128>}, {pipeline_mode = #tpu.pipeline_mode<synchronous>, transform_indices = @transform_11, window_bounds = array<i64: 16, 128>}, {pipeline_mode = #tpu.pipeline_mode<synchronous>, transform_indices = @transform_12, window_bounds = array<i64: 16, 128>}, {pipeline_mode = #tpu.pipeline_mode<synchronous>, transform_indices = @transform_13, window_bounds = array<i64: 1, 128>}, {pipeline_mode = #tpu.pipeline_mode<synchronous>, transform_indices = @transform_14, window_bounds = array<i64: 1, 128>}, {pipeline_mode = #tpu.pipeline_mode<synchronous>, transform_indices = @transform_15, window_bounds = array<i64: 1, 128>}, {transform_indices = @transform_16, window_bounds = array<i64: 1, 8, 8, 128>}]} {
    %c0 = arith.constant 0 : index
    %c0_0 = arith.constant 0 : index
    %c0_1 = arith.constant 0 : index
    %0 = vector.load %arg4[%c0, %c0_0, %c0_1] : memref<1x8x16xbf16, #tpu.memory_space<vmem>>, vector<1x8x16xbf16>
    %1 = vector.shape_cast %0 : vector<1x8x16xbf16> to vector<8x16xbf16>
    %c0_2 = arith.constant 0 : index
    %c0_3 = arith.constant 0 : index
    %2 = vector.load %arg8[%c0_2, %c0_3] : memref<16x128xbf16, #tpu.memory_space<vmem>>, vector<16x128xbf16>
    %cst = arith.constant dense<0.000000e+00> : vector<8x128xf32>
    %3 = tpu.matmul %1, %2, %cst {dimension_numbers = #tpu.dot_dimension_numbers<[1], [0], [0], [1], [0, 0, 1, 1], [], []>} : vector<8x16xbf16>, vector<16x128xbf16>, vector<8x128xf32> -> vector<8x128xf32>
    %c0_4 = arith.constant 0 : index
    %c0_5 = arith.constant 0 : index
    %4 = vector.load %arg15[%c0_4, %c0_5] : memref<16x128xbf16, #tpu.memory_space<vmem>>, vector<16x128xbf16>
    %cst_6 = arith.constant dense<0.000000e+00> : vector<8x128xf32>
    %5 = tpu.matmul %1, %4, %cst_6 {dimension_numbers = #tpu.dot_dimension_numbers<[1], [0], [0], [1], [0, 0, 1, 1], [], []>} : vector<8x16xbf16>, vector<16x128xbf16>, vector<8x128xf32> -> vector<8x128xf32>
    %c0_7 = arith.constant 0 : index
    %c0_8 = arith.constant 0 : index
    %c0_9 = arith.constant 0 : index
    %6 = vector.load %arg3[%c0_7, %c0_8, %c0_9] : memref<1x8x16xbf16, #tpu.memory_space<vmem>>, vector<1x8x16xbf16>
    %7 = vector.shape_cast %6 : vector<1x8x16xbf16> to vector<8x16xbf16>
    %c0_10 = arith.constant 0 : index
    %c0_11 = arith.constant 0 : index
    %c0_12 = arith.constant 0 : index
    %c0_13 = arith.constant 0 : index
    %8 = vector.load %arg5[%c0_10, %c0_11, %c0_12, %c0_13] : memref<1x8x8x8xf32, #tpu.memory_space<vmem>>, vector<1x8x8x8xf32>
    %9 = vector.shape_cast %8 : vector<1x8x8x8xf32> to vector<8x8x8xf32>
    %10 = vector.shape_cast %9 : vector<8x8x8xf32> to vector<64x8xf32>
    %11 = arith.truncf %10 : vector<64x8xf32> to vector<64x8xbf16>
    %c0_14 = arith.constant 0 : index
    %c0_15 = arith.constant 0 : index
    %12 = vector.load %arg7[%c0_14, %c0_15] : memref<16x128xbf16, #tpu.memory_space<vmem>>, vector<16x128xbf16>
    %cst_16 = arith.constant dense<0.000000e+00> : vector<8x128xf32>
    %13 = tpu.matmul %7, %12, %cst_16 {dimension_numbers = #tpu.dot_dimension_numbers<[1], [0], [0], [1], [0, 0, 1, 1], [], []>} : vector<8x16xbf16>, vector<16x128xbf16>, vector<8x128xf32> -> vector<8x128xf32>
    %c0_17 = arith.constant 0 : index
    %c0_18 = arith.constant 0 : index
    %14 = vector.load %arg9[%c0_17, %c0_18] : memref<1x128xf32, #tpu.memory_space<vmem>>, vector<1x128xf32>
    %15 = vector.broadcast %14 : vector<1x128xf32> to vector<8x128xf32>
    %16 = arith.addf %13, %15 : vector<8x128xf32>
    %c0_19 = arith.constant 0 : index
    %c0_20 = arith.constant 0 : index
    %17 = vector.load %arg6[%c0_19, %c0_20] : memref<8x128xbf16, #tpu.memory_space<vmem>>, vector<8x128xbf16>
    %cst_21 = arith.constant dense<0.000000e+00> : vector<64x128xf32>
    %18 = tpu.matmul %11, %17, %cst_21 {dimension_numbers = #tpu.dot_dimension_numbers<[1], [0], [0], [1], [0, 0, 1, 1], [], []>} : vector<64x8xbf16>, vector<8x128xbf16>, vector<64x128xf32> -> vector<64x128xf32>
    %19 = vector.shape_cast %18 : vector<64x128xf32> to vector<8x8x128xf32>
    %20 = vector.shape_cast %16 : vector<8x128xf32> to vector<8x1x128xf32>
    %21 = vector.broadcast %20 : vector<8x1x128xf32> to vector<8x8x128xf32>
    %22 = arith.addf %19, %21 : vector<8x8x128xf32>
    %23 = vector.shape_cast %3 : vector<8x128xf32> to vector<1x8x128xf32>
    %24 = vector.broadcast %23 : vector<1x8x128xf32> to vector<8x8x128xf32>
    %25 = arith.addf %22, %24 : vector<8x8x128xf32>
    %cst_22 = arith.constant 0.000000e+00 : f32
    %26 = vector.broadcast %cst_22 : f32 to vector<8x8x128xf32>
    %27 = arith.maximumf %25, %26 : vector<8x8x128xf32>
    %28 = vector.shape_cast %27 : vector<8x8x128xf32> to vector<64x128xf32>
    %29 = arith.truncf %28 : vector<64x128xf32> to vector<64x128xbf16>
    %c0_23 = arith.constant 0 : index
    %c0_24 = arith.constant 0 : index
    %30 = vector.load %arg10[%c0_23, %c0_24] : memref<128x128xbf16, #tpu.memory_space<vmem>>, vector<128x128xbf16>
    %cst_25 = arith.constant dense<0.000000e+00> : vector<64x128xf32>
    %31 = tpu.matmul %29, %30, %cst_25 {dimension_numbers = #tpu.dot_dimension_numbers<[1], [0], [0], [1], [0, 0, 1, 1], [], []>} : vector<64x128xbf16>, vector<128x128xbf16>, vector<64x128xf32> -> vector<64x128xf32>
    %c0_26 = arith.constant 0 : index
    %c0_27 = arith.constant 0 : index
    %32 = vector.load %arg11[%c0_26, %c0_27] : memref<1x128xf32, #tpu.memory_space<vmem>>, vector<1x128xf32>
    %33 = vector.broadcast %32 : vector<1x128xf32> to vector<64x128xf32>
    %34 = arith.addf %31, %33 : vector<64x128xf32>
    %cst_28 = arith.constant 0.000000e+00 : f32
    %35 = vector.broadcast %cst_28 : f32 to vector<64x128xf32>
    %36 = arith.maximumf %34, %35 : vector<64x128xf32>
    %37 = arith.truncf %36 : vector<64x128xf32> to vector<64x128xbf16>
    %c0_29 = arith.constant 0 : index
    %c0_30 = arith.constant 0 : index
    %38 = vector.load %arg14[%c0_29, %c0_30] : memref<16x128xbf16, #tpu.memory_space<vmem>>, vector<16x128xbf16>
    %cst_31 = arith.constant dense<0.000000e+00> : vector<8x128xf32>
    %39 = tpu.matmul %7, %38, %cst_31 {dimension_numbers = #tpu.dot_dimension_numbers<[1], [0], [0], [1], [0, 0, 1, 1], [], []>} : vector<8x16xbf16>, vector<16x128xbf16>, vector<8x128xf32> -> vector<8x128xf32>
    %c0_32 = arith.constant 0 : index
    %c0_33 = arith.constant 0 : index
    %40 = vector.load %arg16[%c0_32, %c0_33] : memref<1x128xf32, #tpu.memory_space<vmem>>, vector<1x128xf32>
    %41 = vector.broadcast %40 : vector<1x128xf32> to vector<8x128xf32>
    %42 = arith.addf %39, %41 : vector<8x128xf32>
    %c0_34 = arith.constant 0 : index
    %c0_35 = arith.constant 0 : index
    %43 = vector.load %arg12[%c0_34, %c0_35] : memref<128x128xbf16, #tpu.memory_space<vmem>>, vector<128x128xbf16>
    %cst_36 = arith.constant dense<0.000000e+00> : vector<64x128xf32>
    %44 = tpu.matmul %37, %43, %cst_36 {dimension_numbers = #tpu.dot_dimension_numbers<[1], [0], [0], [1], [0, 0, 1, 1], [], []>} : vector<64x128xbf16>, vector<128x128xbf16>, vector<64x128xf32> -> vector<64x128xf32>
    %c0_37 = arith.constant 0 : index
    %c0_38 = arith.constant 0 : index
    %45 = vector.load %arg13[%c0_37, %c0_38] : memref<8x128xbf16, #tpu.memory_space<vmem>>, vector<8x128xbf16>
    %cst_39 = arith.constant dense<0.000000e+00> : vector<64x128xf32>
    %46 = tpu.matmul %11, %45, %cst_39 {dimension_numbers = #tpu.dot_dimension_numbers<[1], [0], [0], [1], [0, 0, 1, 1], [], []>} : vector<64x8xbf16>, vector<8x128xbf16>, vector<64x128xf32> -> vector<64x128xf32>
    %47 = arith.addf %44, %46 : vector<64x128xf32>
    %48 = vector.shape_cast %47 : vector<64x128xf32> to vector<8x8x128xf32>
    %49 = vector.shape_cast %42 : vector<8x128xf32> to vector<8x1x128xf32>
    %50 = vector.broadcast %49 : vector<8x1x128xf32> to vector<8x8x128xf32>
    %51 = arith.addf %48, %50 : vector<8x8x128xf32>
    %52 = vector.shape_cast %5 : vector<8x128xf32> to vector<1x8x128xf32>
    %53 = vector.broadcast %52 : vector<1x8x128xf32> to vector<8x8x128xf32>
    %54 = arith.addf %51, %53 : vector<8x8x128xf32>
    %cst_40 = arith.constant dense<0.000000e+00> : vector<8x8xf32>
    %55 = vector.multi_reduction <add>, %54, %cst_40 [2] : vector<8x8x128xf32> to vector<8x8xf32>
    %56 = vector.shape_cast %55 : vector<8x8xf32> to vector<8x8x1xf32>
    %57 = arith.mulf %54, %54 : vector<8x8x128xf32>
    %cst_41 = arith.constant dense<0.000000e+00> : vector<8x8xf32>
    %58 = vector.multi_reduction <add>, %57, %cst_41 [2] : vector<8x8x128xf32> to vector<8x8xf32>
    %59 = vector.shape_cast %58 : vector<8x8xf32> to vector<8x8x1xf32>
    %cst_42 = arith.constant 6.250000e-02 : f32
    %60 = vector.broadcast %cst_42 : f32 to vector<8x8x1xf32>
    %61 = arith.mulf %56, %60 : vector<8x8x1xf32>
    %cst_43 = arith.constant 6.250000e-02 : f32
    %62 = vector.broadcast %cst_43 : f32 to vector<8x8x1xf32>
    %63 = arith.mulf %59, %62 : vector<8x8x1xf32>
    %64 = arith.mulf %61, %61 : vector<8x8x1xf32>
    %65 = arith.subf %63, %64 : vector<8x8x1xf32>
    %cst_44 = arith.constant 0.000000e+00 : f32
    %66 = vector.broadcast %cst_44 : f32 to vector<8x8x1xf32>
    %67 = arith.maximumf %65, %66 : vector<8x8x1xf32>
    %68 = vector.broadcast %61 : vector<8x8x1xf32> to vector<8x8x128xf32>
    %69 = arith.subf %54, %68 : vector<8x8x128xf32>
    %cst_45 = arith.constant 9.99999974E-6 : f32
    %70 = vector.broadcast %cst_45 : f32 to vector<8x8x1xf32>
    %71 = arith.addf %67, %70 : vector<8x8x1xf32>
    %72 = math.rsqrt %71 : vector<8x8x1xf32>
    %73 = vector.broadcast %72 : vector<8x8x1xf32> to vector<8x8x128xf32>
    %74 = arith.mulf %69, %73 : vector<8x8x128xf32>
    %c0_46 = arith.constant 0 : index
    %c0_47 = arith.constant 0 : index
    %75 = vector.load %arg17[%c0_46, %c0_47] : memref<1x128xf32, #tpu.memory_space<vmem>>, vector<1x128xf32>
    %76 = vector.shape_cast %75 : vector<1x128xf32> to vector<1x1x128xf32>
    %77 = vector.broadcast %76 : vector<1x1x128xf32> to vector<8x8x128xf32>
    %78 = arith.mulf %74, %77 : vector<8x8x128xf32>
    %c0_48 = arith.constant 0 : index
    %c0_49 = arith.constant 0 : index
    %79 = vector.load %arg18[%c0_48, %c0_49] : memref<1x128xf32, #tpu.memory_space<vmem>>, vector<1x128xf32>
    %80 = vector.shape_cast %79 : vector<1x128xf32> to vector<1x1x128xf32>
    %81 = vector.broadcast %80 : vector<1x1x128xf32> to vector<8x8x128xf32>
    %82 = arith.addf %78, %81 : vector<8x8x128xf32>
    %c0_50 = arith.constant 0 : index
    %c0_51 = arith.constant 0 : index
    %c0_52 = arith.constant 0 : index
    %c0_53 = arith.constant 0 : index
    %83 = vector.load %arg19[%c0_50, %c0_51, %c0_52, %c0_53] : memref<1x8x8x128xf32, #tpu.memory_space<vmem>>, vector<1x8x8x128xf32>
    %84 = vector.shape_cast %83 : vector<1x8x8x128xf32> to vector<8x8x128xf32>
    %85 = vector.shape_cast %82 : vector<8x8x128xf32> to vector<1x8x8x128xf32>
    tpu.vector_store %arg19[%c0_50, %c0_51, %c0_52, %c0_53], %85 {strides = array<i32>} : memref<1x8x8x128xf32, #tpu.memory_space<vmem>>, vector<1x8x8x128xf32>,
    return
  }
  func.func @transform_0(%arg0: i32, %arg1: i32, %arg2: i32) -> (i32, i32, i32) {
    %c0_i32 = arith.constant 0 : i32
    %c0_i32_0 = arith.constant 0 : i32
    return %arg2, %arg0, %c0_i32 : i32, i32, i32
  }
  func.func @transform_1(%arg0: i32, %arg1: i32, %arg2: i32) -> (i32, i32, i32) {
    %c0_i32 = arith.constant 0 : i32
    %c0_i32_0 = arith.constant 0 : i32
    return %arg2, %arg1, %c0_i32 : i32, i32, i32
  }
  func.func @transform_2(%arg0: i32, %arg1: i32, %arg2: i32) -> (i32, i32, i32, i32) {
    %c0_i32 = arith.constant 0 : i32
    %c0_i32_0 = arith.constant 0 : i32
    return %arg2, %arg0, %arg1, %c0_i32 : i32, i32, i32, i32
  }
  func.func @transform_3(%arg0: i32, %arg1: i32, %arg2: i32) -> (i32, i32) {
    %c0_i32 = arith.constant 0 : i32
    %c0_i32_0 = arith.constant 0 : i32
    %c0_i32_1 = arith.constant 0 : i32
    return %c0_i32, %c0_i32_0 : i32, i32
  }
  func.func @transform_4(%arg0: i32, %arg1: i32, %arg2: i32) -> (i32, i32) {
    %c0_i32 = arith.constant 0 : i32
    %c0_i32_0 = arith.constant 0 : i32
    %c0_i32_1 = arith.constant 0 : i32
    return %c0_i32, %c0_i32_0 : i32, i32
  }
  func.func @transform_5(%arg0: i32, %arg1: i32, %arg2: i32) -> (i32, i32) {
    %c0_i32 = arith.constant 0 : i32
    %c0_i32_0 = arith.constant 0 : i32
    %c0_i32_1 = arith.constant 0 : i32
    return %c0_i32, %c0_i32_0 : i32, i32
  }
  func.func @transform_6(%arg0: i32, %arg1: i32, %arg2: i32) -> (i32, i32) {
    %c0_i32 = arith.constant 0 : i32
    %c0_i32_0 = arith.constant 0 : i32
    %c0_i32_1 = arith.constant 0 : i32
    return %c0_i32, %c0_i32_0 : i32, i32
  }
  func.func @transform_7(%arg0: i32, %arg1: i32, %arg2: i32) -> (i32, i32) {
    %c0_i32 = arith.constant 0 : i32
    %c0_i32_0 = arith.constant 0 : i32
    %c0_i32_1 = arith.constant 0 : i32
    return %c0_i32, %c0_i32_0 : i32, i32
  }
  func.func @transform_8(%arg0: i32, %arg1: i32, %arg2: i32) -> (i32, i32) {
    %c0_i32 = arith.constant 0 : i32
    %c0_i32_0 = arith.constant 0 : i32
    %c0_i32_1 = arith.constant 0 : i32
    return %c0_i32, %c0_i32_0 : i32, i32
  }
  func.func @transform_9(%arg0: i32, %arg1: i32, %arg2: i32) -> (i32, i32) {
    %c0_i32 = arith.constant 0 : i32
    %c0_i32_0 = arith.constant 0 : i32
    %c0_i32_1 = arith.constant 0 : i32
    return %c0_i32, %c0_i32_0 : i32, i32
  }
  func.func @transform_10(%arg0: i32, %arg1: i32, %arg2: i32) -> (i32, i32) {
    %c0_i32 = arith.constant 0 : i32
    %c0_i32_0 = arith.constant 0 : i32
    %c0_i32_1 = arith.constant 0 : i32
    return %c0_i32, %c0_i32_0 : i32, i32
  }
  func.func @transform_11(%arg0: i32, %arg1: i32, %arg2: i32) -> (i32, i32) {
    %c0_i32 = arith.constant 0 : i32
    %c0_i32_0 = arith.constant 0 : i32
    %c0_i32_1 = arith.constant 0 : i32
    return %c0_i32, %c0_i32_0 : i32, i32
  }
  func.func @transform_12(%arg0: i32, %arg1: i32, %arg2: i32) -> (i32, i32) {
    %c0_i32 = arith.constant 0 : i32
    %c0_i32_0 = arith.constant 0 : i32
    %c0_i32_1 = arith.constant 0 : i32
    return %c0_i32, %c0_i32_0 : i32, i32
  }
  func.func @transform_13(%arg0: i32, %arg1: i32, %arg2: i32) -> (i32, i32) {
    %c0_i32 = arith.constant 0 : i32
    %c0_i32_0 = arith.constant 0 : i32
    %c0_i32_1 = arith.constant 0 : i32
    return %c0_i32, %c0_i32_0 : i32, i32
  }
  func.func @transform_14(%arg0: i32, %arg1: i32, %arg2: i32) -> (i32, i32) {
    %c0_i32 = arith.constant 0 : i32
    %c0_i32_0 = arith.constant 0 : i32
    %c0_i32_1 = arith.constant 0 : i32
    return %c0_i32, %c0_i32_0 : i32, i32
  }
  func.func @transform_15(%arg0: i32, %arg1: i32, %arg2: i32) -> (i32, i32) {
    %c0_i32 = arith.constant 0 : i32
    %c0_i32_0 = arith.constant 0 : i32
    %c0_i32_1 = arith.constant 0 : i32
    return %c0_i32, %c0_i32_0 : i32, i32
  }
  func.func @transform_16(%arg0: i32, %arg1: i32, %arg2: i32) -> (i32, i32, i32, i32) {
    %c0_i32 = arith.constant 0 : i32
    %c0_i32_0 = arith.constant 0 : i32
    return %arg2, %arg0, %arg1, %c0_i32 : i32, i32, i32, i32
  }
}

</mosaic_0001>

<llo_original>
// kernel: tpu_custom_call.1
$region0: #{tpu_custom_call.1}
  #allocation0 [shape = 'u32[]', space=smem, size = 0x4, offset = 0x4, fixed_abs, tag = 'smem constant byte address 0x4 - core index']
  #allocation1 [shape = 'u32[144,128]{1,0:T(1,128)}', space=vmem, size = 0x12000, scoped, tag = 'internal scratch']
  %s0 = inlined_call_operand.hbm [shape: bf16[2,8,16], index: 0, kind: input, shape index: {}]
  %s1 = inlined_call_operand.hbm [shape: bf16[2,8,16], index: 1, kind: input, shape index: {}]
  %s2 = inlined_call_operand.hbm [shape: f32[2,8,8,8], index: 2, kind: input, shape index: {}]
  %s3 = inlined_call_operand.hbm [shape: bf16[8,128], index: 3, kind: input, shape index: {}]
  %s4 = inlined_call_operand.vmem [shape: bf16[16,128], index: 4, kind: input, shape index: {}]
  %s5 = inlined_call_operand.vmem [shape: bf16[16,128], index: 5, kind: input, shape index: {}]
  %s6 = inlined_call_operand.vmem [shape: f32[1,128], index: 6, kind: input, shape index: {}]
  %s7 = inlined_call_operand.hbm [shape: bf16[128,128], index: 7, kind: input, shape index: {}]
  %s8 = inlined_call_operand.hbm [shape: f32[1,128], index: 8, kind: input, shape index: {}]
  %s9 = inlined_call_operand.hbm [shape: bf16[128,128], index: 9, kind: input, shape index: {}]
  %s10 = inlined_call_operand.vmem [shape: bf16[8,128], index: 10, kind: input, shape index: {}]
  %s11 = inlined_call_operand.vmem [shape: bf16[16,128], index: 11, kind: input, shape index: {}]
  %s12 = inlined_call_operand.vmem [shape: bf16[16,128], index: 12, kind: input, shape index: {}]
  %s13 = inlined_call_operand.vmem [shape: f32[1,128], index: 13, kind: input, shape index: {}]
  %s14 = inlined_call_operand.vmem [shape: f32[1,128], index: 14, kind: input, shape index: {}]
  %s15 = inlined_call_operand.vmem [shape: f32[1,128], index: 15, kind: input, shape index: {}]
  %s16 = inlined_call_operand.hbm [shape: f32[2,8,8,128], index: 16, kind: output, shape index: {}]
  %s17 = sld [smem:[#allocation0]]
  $region125: #{tpu_custom_call.1} parent=0
    _
  %s19 = ssub.s32 1, %s17
  %s20 = scalar_select 0, %s19, %s17
  $region1: #{tpu_custom_call.1} parent=0
    #allocation2 [shape = 'u8[4096]{0}', space=vmem, size = 0x1000, scoped, tag = 'input window, operand 0']
    #allocation3 [shape = 's32[2]{0}', space=sflag, size = 0x8, scoped, tag = 'scoped memory for tpu_custom_call.1']
    #allocation4 [shape = 's32[2]{0}', space=sflag, size = 0x8, scoped, tag = 'scoped memory for tpu_custom_call.1']
    #allocation5 [shape = 'u8[4096]{0}', space=vmem, size = 0x1000, scoped, tag = 'input window, operand 1']
    #allocation6 [shape = 's32[2]{0}', space=sflag, size = 0x8, scoped, tag = 'scoped memory for tpu_custom_call.1']
    #allocation7 [shape = 'u8[65536]{0}', space=vmem, size = 0x10000, scoped, tag = 'input window, operand 2']
    #allocation8 [shape = 'u8[2048]{0}', space=vmem, size = 0x800, scoped, tag = 'input window, operand 3, single buffered']
    #allocation9 [shape = 's32[1]{0}', space=sflag, size = 0x4, scoped, tag = 'scoped memory for tpu_custom_call.1']
    #allocation10 [shape = 'u8[32768]{0}', space=vmem, size = 0x8000, scoped, tag = 'input window, operand 7, single buffered']
    #allocation11 [shape = 'u8[512]{0}', space=vmem, size = 0x400, scoped, tag = 'input window, operand 8, single buffered']
    #allocation12 [shape = 's32[1]{0}', space=sflag, size = 0x4, scoped, tag = 'scoped memory for tpu_custom_call.1']
    #allocation13 [shape = 'u8[32768]{0}', space=vmem, size = 0x8000, scoped, tag = 'input window, operand 9, single buffered']
    #allocation14 [shape = 'u8[65536]{0}', space=vmem, size = 0x10000, scoped, tag = 'output window, operand 0']
    %21 = vsyncpa [#allocation3], 0
    %s22 = scalar_lea.sflag [#allocation3], 1
    %23 = vsyncpa %s22, 0
    %24 = vsyncpa [#allocation6], 0
    %s25 = scalar_lea.sflag [#allocation6], 1
    %26 = vsyncpa %s25, 0
    %27 = vsyncpa [#allocation9], 0
    %28 = vsyncpa [#allocation12], 0
    %29 = vsyncpa [#allocation4], 0
    %s30 = scalar_lea.sflag [#allocation4], 1
    %31 = vsyncpa %s30, 0
    loop: start=0, step=1, limit=4
    $region2: #{tpu_custom_call.1} parent=1 // loop_pre_header
      _
    $region3: #{tpu_custom_call.1} parent=1 // loop_header
      %s33 = sphi 0, %s37
      %p34 = scmp.ge.s32.totalorder %s33, 4
      %s40 = sphi 0, %s59
      %s41 = sphi 0, %s55
      %s42 = sphi 0, %s51
      %s43 = sphi 0, %s40
      %s44 = sphi 0, %s41
      %s45 = sphi 0, %s42
      %s46 = sphi 0, %s43
      %s47 = sphi 0, %s44
      %s48 = sphi 0, %s45
      %s64 = sphi 0, %s66
      %s67 = sphi 0, %s64
      %s68 = sphi 0, %s67
      %s84 = sphi 0, %s68
      %s92 = sphi 0, %s94
      %s95 = sphi 0, %s92
      %s96 = sphi 0, %s95
      %s112 = sphi 0, %s96
      %s122 = sphi 0, %s124
      %s125 = sphi 0, %s122
      %s126 = sphi 0, %s125
      %s142 = sphi 0, %s126
      %s146 = sphi 0, %s146
      %s148 = sphi 0, %s146
      %s149 = sphi 0, %s148
      %s163 = sphi 0, %s149
      %s167 = sphi 0, %s167
      %s169 = sphi 0, %s167
      %s170 = sphi 0, %s169
      %s184 = sphi 0, %s170
      %s188 = sphi 0, %s188
      %s190 = sphi 0, %s188
      %s191 = sphi 0, %s190
      %s205 = sphi 0, %s191
      %s209 = sphi 0, %s209
      %s211 = sphi 0, %s209
      %s212 = sphi 0, %s211
      %s226 = sphi 0, %s212
      %s230 = sphi 0, %s230
      %s232 = sphi 0, %s230
      %s233 = sphi 0, %s232
      %s247 = sphi 0, %s233
      %s251 = sphi 0, %s251
      %s253 = sphi 0, %s251
      %s254 = sphi 0, %s253
      %s268 = sphi 0, %s254
      %s272 = sphi 0, %s272
      %s274 = sphi 0, %s272
      %s275 = sphi 0, %s274
      %s289 = sphi 0, %s275
      %s293 = sphi 0, %s293
      %s295 = sphi 0, %s293
      %s296 = sphi 0, %s295
      %s310 = sphi 0, %s296
      %s314 = sphi 0, %s314
      %s316 = sphi 0, %s314
      %s317 = sphi 0, %s316
      %s331 = sphi 0, %s317
      %s335 = sphi 0, %s335
      %s337 = sphi 0, %s335
      %s338 = sphi 0, %s337
      %s352 = sphi 0, %s338
      %s356 = sphi 0, %s356
      %s358 = sphi 0, %s356
      %s359 = sphi 0, %s358
      %s373 = sphi 0, %s359
      %s377 = sphi 0, %s377
      %s379 = sphi 0, %s377
      %s380 = sphi 0, %s379
      %s394 = sphi 0, %s380
      %s398 = sphi 0, %s398
      %s400 = sphi 0, %s398
      %s401 = sphi 0, %s400
      %s415 = sphi 0, %s401
      %s425 = sphi 0, %s427
      %s428 = sphi 0, %s425
      %s429 = sphi 0, %s428
      %s445 = sphi 0, %s429
    $region4: #{tpu_custom_call.1} parent=1 // loop_header_branch
      %36 = sbr.rel (%p34) target = $region8
    $region5: #{tpu_custom_call.1} parent=1 // loop_body
      %s38 = ssub.s32 %s33, 1
      %s39 = ssub.s32 %s33, 2
      %s49 = sadd.s32 1, %s42
      %p50 = scmp.ge.s32.totalorder %s49, 2
      %s51 = scalar_select %p50, 0, %s49
      %s52 = sadd.s32 1, %s41
      %s53 = scalar_select %p50, %s52, %s41
      %p54 = scmp.ge.s32.totalorder %s53, 1
      %s55 = scalar_select %p54, 0, %s53
      %s56 = sadd.s32 1, %s40
      %s57 = scalar_select %p54, %s56, %s40
      %p58 = scmp.ge.s32.totalorder %s57, 1
      %s59 = scalar_select %p58, 0, %s57
      %s60 = ssub.s32 %s42, %s51
      %s61 = ssub.s32 %s40, %s59
      %s62 = sor.u32 %s60, %s61
      %p63 = scmp.eq.s32.totalorder %s62, 0
      %s65 = sadd.s32 %s64, 1
      %s66 = scalar_select %p63, %s64, %s65
      %p69 = pneg %p63
      %p70 = scmp.eq.s32.totalorder %s33, 1
      %p71 = por %p69, %p70
      %p72 = scmp.ne.s32.totalorder %s64, %s67
      %p73 = scmp.eq.s32.totalorder %s33, 0
      %p74 = por %p72, %p73
      %p75 = scmp.ne.s32.totalorder %s64, %s67
      %p76 = scmp.eq.s32.totalorder %s38, 1
      %p77 = por %p75, %p76
      %p78 = scmp.ne.s32.totalorder %s67, %s68
      %p79 = scmp.eq.s32.totalorder %s38, 0
      %p80 = por %p78, %p79
      %p81 = scmp.ne.s32.totalorder %s67, %s68
      %p82 = scmp.eq.s32.totalorder %s39, 1
      %p83 = por %p81, %p82
      %p85 = scmp.ne.s32.totalorder %s68, %s84
      %p86 = scmp.eq.s32.totalorder %s39, 0
      %p87 = por %p85, %p86
      %s88 = ssub.s32 %s42, %s51
      %s89 = ssub.s32 %s41, %s55
      %s90 = sor.u32 %s88, %s89
      %p91 = scmp.eq.s32.totalorder %s90, 0
      %s93 = sadd.s32 %s92, 1
      %s94 = scalar_select %p91, %s92, %s93
      %p97 = pneg %p91
      %p98 = scmp.eq.s32.totalorder %s33, 1
      %p99 = por %p97, %p98
      %p100 = scmp.ne.s32.totalorder %s92, %s95
      %p101 = scmp.eq.s32.totalorder %s33, 0
      %p102 = por %p100, %p101
      %p103 = scmp.ne.s32.totalorder %s92, %s95
      %p104 = scmp.eq.s32.totalorder %s38, 1
      %p105 = por %p103, %p104
      %p106 = scmp.ne.s32.totalorder %s95, %s96
      %p107 = scmp.eq.s32.totalorder %s38, 0
      %p108 = por %p106, %p107
      %p109 = scmp.ne.s32.totalorder %s95, %s96
      %p110 = scmp.eq.s32.totalorder %s39, 1
      %p111 = por %p109, %p110
      %p113 = scmp.ne.s32.totalorder %s96, %s112
      %p114 = scmp.eq.s32.totalorder %s39, 0
      %p115 = por %p113, %p114
      %s116 = ssub.s32 %s42, %s51
      %s117 = ssub.s32 %s40, %s59
      %s118 = sor.u32 %s116, %s117
      %s119 = ssub.s32 %s41, %s55
      %s120 = sor.u32 %s118, %s119
      %p121 = scmp.eq.s32.totalorder %s120, 0
      %s123 = sadd.s32 %s122, 1
      %s124 = scalar_select %p121, %s122, %s123
      %p127 = pneg %p121
      %p128 = scmp.eq.s32.totalorder %s33, 1
      %p129 = por %p127, %p128
      %p130 = scmp.ne.s32.totalorder %s122, %s125
      %p131 = scmp.eq.s32.totalorder %s33, 0
      %p132 = por %p130, %p131
      %p133 = scmp.ne.s32.totalorder %s122, %s125
      %p134 = scmp.eq.s32.totalorder %s38, 1
      %p135 = por %p133, %p134
      %p136 = scmp.ne.s32.totalorder %s125, %s126
      %p137 = scmp.eq.s32.totalorder %s38, 0
      %p138 = por %p136, %p137
      %p139 = scmp.ne.s32.totalorder %s125, %s126
      %p140 = scmp.eq.s32.totalorder %s39, 1
      %p141 = por %p139, %p140
      %p143 = scmp.ne.s32.totalorder %s126, %s142
      %p144 = scmp.eq.s32.totalorder %s39, 0
      %p145 = por %p143, %p144
      %s147 = sadd.s32 %s146, 1
      %p150 = scmp.eq.s32.totalorder %s33, 1
      %p151 = scmp.ne.s32.totalorder %s146, %s148
      %p152 = scmp.eq.s32.totalorder %s33, 0
      %p153 = por %p151, %p152
      %p154 = scmp.ne.s32.totalorder %s146, %s148
      %p155 = scmp.eq.s32.totalorder %s38, 1
      %p156 = por %p154, %p155
      %p157 = scmp.ne.s32.totalorder %s148, %s149
      %p158 = scmp.eq.s32.totalorder %s38, 0
      %p159 = por %p157, %p158
      %p160 = scmp.ne.s32.totalorder %s148, %s149
      %p161 = scmp.eq.s32.totalorder %s39, 1
      %p162 = por %p160, %p161
      %p164 = scmp.ne.s32.totalorder %s149, %s163
      %p165 = scmp.eq.s32.totalorder %s39, 0
      %p166 = por %p164, %p165
      %s168 = sadd.s32 %s167, 1
      %p171 = scmp.eq.s32.totalorder %s33, 1
      %p172 = scmp.ne.s32.totalorder %s167, %s169
      %p173 = scmp.eq.s32.totalorder %s33, 0
      %p174 = por %p172, %p173
      %p175 = scmp.ne.s32.totalorder %s167, %s169
      %p176 = scmp.eq.s32.totalorder %s38, 1
      %p177 = por %p175, %p176
      %p178 = scmp.ne.s32.totalorder %s169, %s170
      %p179 = scmp.eq.s32.totalorder %s38, 0
      %p180 = por %p178, %p179
      %p181 = scmp.ne.s32.totalorder %s169, %s170
      %p182 = scmp.eq.s32.totalorder %s39, 1
      %p183 = por %p181, %p182
      %p185 = scmp.ne.s32.totalorder %s170, %s184
      %p186 = scmp.eq.s32.totalorder %s39, 0
      %p187 = por %p185, %p186
      %s189 = sadd.s32 %s188, 1
      %p192 = scmp.eq.s32.totalorder %s33, 1
      %p193 = scmp.ne.s32.totalorder %s188, %s190
      %p194 = scmp.eq.s32.totalorder %s33, 0
      %p195 = por %p193, %p194
      %p196 = scmp.ne.s32.totalorder %s188, %s190
      %p197 = scmp.eq.s32.totalorder %s38, 1
      %p198 = por %p196, %p197
      %p199 = scmp.ne.s32.totalorder %s190, %s191
      %p200 = scmp.eq.s32.totalorder %s38, 0
      %p201 = por %p199, %p200
      %p202 = scmp.ne.s32.totalorder %s190, %s191
      %p203 = scmp.eq.s32.totalorder %s39, 1
      %p204 = por %p202, %p203
      %p206 = scmp.ne.s32.totalorder %s191, %s205
      %p207 = scmp.eq.s32.totalorder %s39, 0
      %p208 = por %p206, %p207
      %s210 = sadd.s32 %s209, 1
      %p213 = scmp.eq.s32.totalorder %s33, 1
      %p214 = scmp.ne.s32.totalorder %s209, %s211
      %p215 = scmp.eq.s32.totalorder %s33, 0
      %p216 = por %p214, %p215
      %p217 = scmp.ne.s32.totalorder %s209, %s211
      %p218 = scmp.eq.s32.totalorder %s38, 1
      %p219 = por %p217, %p218
      %p220 = scmp.ne.s32.totalorder %s211, %s212
      %p221 = scmp.eq.s32.totalorder %s38, 0
      %p222 = por %p220, %p221
      %p223 = scmp.ne.s32.totalorder %s211, %s212
      %p224 = scmp.eq.s32.totalorder %s39, 1
      %p225 = por %p223, %p224
      %p227 = scmp.ne.s32.totalorder %s212, %s226
      %p228 = scmp.eq.s32.totalorder %s39, 0
      %p229 = por %p227, %p228
      %s231 = sadd.s32 %s230, 1
      %p234 = scmp.eq.s32.totalorder %s33, 1
      %p235 = scmp.ne.s32.totalorder %s230, %s232
      %p236 = scmp.eq.s32.totalorder %s33, 0
      %p237 = por %p235, %p236
      %p238 = scmp.ne.s32.totalorder %s230, %s232
      %p239 = scmp.eq.s32.totalorder %s38, 1
      %p240 = por %p238, %p239
      %p241 = scmp.ne.s32.totalorder %s232, %s233
      %p242 = scmp.eq.s32.totalorder %s38, 0
      %p243 = por %p241, %p242
      %p244 = scmp.ne.s32.totalorder %s232, %s233
      %p245 = scmp.eq.s32.totalorder %s39, 1
      %p246 = por %p244, %p245
      %p248 = scmp.ne.s32.totalorder %s233, %s247
      %p249 = scmp.eq.s32.totalorder %s39, 0
      %p250 = por %p248, %p249
      %s252 = sadd.s32 %s251, 1
      %p255 = scmp.eq.s32.totalorder %s33, 1
      %p256 = scmp.ne.s32.totalorder %s251, %s253
      %p257 = scmp.eq.s32.totalorder %s33, 0
      %p258 = por %p256, %p257
      %p259 = scmp.ne.s32.totalorder %s251, %s253
      %p260 = scmp.eq.s32.totalorder %s38, 1
      %p261 = por %p259, %p260
      %p262 = scmp.ne.s32.totalorder %s253, %s254
      %p263 = scmp.eq.s32.totalorder %s38, 0
      %p264 = por %p262, %p263
      %p265 = scmp.ne.s32.totalorder %s253, %s254
      %p266 = scmp.eq.s32.totalorder %s39, 1
      %p267 = por %p265, %p266
      %p269 = scmp.ne.s32.totalorder %s254, %s268
      %p270 = scmp.eq.s32.totalorder %s39, 0
      %p271 = por %p269, %p270
      %s273 = sadd.s32 %s272, 1
      %p276 = scmp.eq.s32.totalorder %s33, 1
      %p277 = scmp.ne.s32.totalorder %s272, %s274
      %p278 = scmp.eq.s32.totalorder %s33, 0
      %p279 = por %p277, %p278
      %p280 = scmp.ne.s32.totalorder %s272, %s274
      %p281 = scmp.eq.s32.totalorder %s38, 1
      %p282 = por %p280, %p281
      %p283 = scmp.ne.s32.totalorder %s274, %s275
      %p284 = scmp.eq.s32.totalorder %s38, 0
      %p285 = por %p283, %p284
      %p286 = scmp.ne.s32.totalorder %s274, %s275
      %p287 = scmp.eq.s32.totalorder %s39, 1
      %p288 = por %p286, %p287
      %p290 = scmp.ne.s32.totalorder %s275, %s289
      %p291 = scmp.eq.s32.totalorder %s39, 0
      %p292 = por %p290, %p291
      %s294 = sadd.s32 %s293, 1
      %p297 = scmp.eq.s32.totalorder %s33, 1
      %p298 = scmp.ne.s32.totalorder %s293, %s295
      %p299 = scmp.eq.s32.totalorder %s33, 0
      %p300 = por %p298, %p299
      %p301 = scmp.ne.s32.totalorder %s293, %s295
      %p302 = scmp.eq.s32.totalorder %s38, 1
      %p303 = por %p301, %p302
      %p304 = scmp.ne.s32.totalorder %s295, %s296
      %p305 = scmp.eq.s32.totalorder %s38, 0
      %p306 = por %p304, %p305
      %p307 = scmp.ne.s32.totalorder %s295, %s296
      %p308 = scmp.eq.s32.totalorder %s39, 1
      %p309 = por %p307, %p308
      %p311 = scmp.ne.s32.totalorder %s296, %s310
      %p312 = scmp.eq.s32.totalorder %s39, 0
      %p313 = por %p311, %p312
      %s315 = sadd.s32 %s314, 1
      %p318 = scmp.eq.s32.totalorder %s33, 1
      %p319 = scmp.ne.s32.totalorder %s314, %s316
      %p320 = scmp.eq.s32.totalorder %s33, 0
      %p321 = por %p319, %p320
      %p322 = scmp.ne.s32.totalorder %s314, %s316
      %p323 = scmp.eq.s32.totalorder %s38, 1
      %p324 = por %p322, %p323
      %p325 = scmp.ne.s32.totalorder %s316, %s317
      %p326 = scmp.eq.s32.totalorder %s38, 0
      %p327 = por %p325, %p326
      %p328 = scmp.ne.s32.totalorder %s316, %s317
      %p329 = scmp.eq.s32.totalorder %s39, 1
      %p330 = por %p328, %p329
      %p332 = scmp.ne.s32.totalorder %s317, %s331
      %p333 = scmp.eq.s32.totalorder %s39, 0
      %p334 = por %p332, %p333
      %s336 = sadd.s32 %s335, 1
      %p339 = scmp.eq.s32.totalorder %s33, 1
      %p340 = scmp.ne.s32.totalorder %s335, %s337
      %p341 = scmp.eq.s32.totalorder %s33, 0
      %p342 = por %p340, %p341
      %p343 = scmp.ne.s32.totalorder %s335, %s337
      %p344 = scmp.eq.s32.totalorder %s38, 1
      %p345 = por %p343, %p344
      %p346 = scmp.ne.s32.totalorder %s337, %s338
      %p347 = scmp.eq.s32.totalorder %s38, 0
      %p348 = por %p346, %p347
      %p349 = scmp.ne.s32.totalorder %s337, %s338
      %p350 = scmp.eq.s32.totalorder %s39, 1
      %p351 = por %p349, %p350
      %p353 = scmp.ne.s32.totalorder %s338, %s352
      %p354 = scmp.eq.s32.totalorder %s39, 0
      %p355 = por %p353, %p354
      %s357 = sadd.s32 %s356, 1
      %p360 = scmp.eq.s32.totalorder %s33, 1
      %p361 = scmp.ne.s32.totalorder %s356, %s358
      %p362 = scmp.eq.s32.totalorder %s33, 0
      %p363 = por %p361, %p362
      %p364 = scmp.ne.s32.totalorder %s356, %s358
      %p365 = scmp.eq.s32.totalorder %s38, 1
      %p366 = por %p364, %p365
      %p367 = scmp.ne.s32.totalorder %s358, %s359
      %p368 = scmp.eq.s32.totalorder %s38, 0
      %p369 = por %p367, %p368
      %p370 = scmp.ne.s32.totalorder %s358, %s359
      %p371 = scmp.eq.s32.totalorder %s39, 1
      %p372 = por %p370, %p371
      %p374 = scmp.ne.s32.totalorder %s359, %s373
      %p375 = scmp.eq.s32.totalorder %s39, 0
      %p376 = por %p374, %p375
      %s378 = sadd.s32 %s377, 1
      %p381 = scmp.eq.s32.totalorder %s33, 1
      %p382 = scmp.ne.s32.totalorder %s377, %s379
      %p383 = scmp.eq.s32.totalorder %s33, 0
      %p384 = por %p382, %p383
      %p385 = scmp.ne.s32.totalorder %s377, %s379
      %p386 = scmp.eq.s32.totalorder %s38, 1
      %p387 = por %p385, %p386
      %p388 = scmp.ne.s32.totalorder %s379, %s380
      %p389 = scmp.eq.s32.totalorder %s38, 0
      %p390 = por %p388, %p389
      %p391 = scmp.ne.s32.totalorder %s379, %s380
      %p392 = scmp.eq.s32.totalorder %s39, 1
      %p393 = por %p391, %p392
      %p395 = scmp.ne.s32.totalorder %s380, %s394
      %p396 = scmp.eq.s32.totalorder %s39, 0
      %p397 = por %p395, %p396
      %s399 = sadd.s32 %s398, 1
      %p402 = scmp.eq.s32.totalorder %s33, 1
      %p403 = scmp.ne.s32.totalorder %s398, %s400
      %p404 = scmp.eq.s32.totalorder %s33, 0
      %p405 = por %p403, %p404
      %p406 = scmp.ne.s32.totalorder %s398, %s400
      %p407 = scmp.eq.s32.totalorder %s38, 1
      %p408 = por %p406, %p407
      %p409 = scmp.ne.s32.totalorder %s400, %s401
      %p410 = scmp.eq.s32.totalorder %s38, 0
      %p411 = por %p409, %p410
      %p412 = scmp.ne.s32.totalorder %s400, %s401
      %p413 = scmp.eq.s32.totalorder %s39, 1
      %p414 = por %p412, %p413
      %p416 = scmp.ne.s32.totalorder %s401, %s415
      %p417 = scmp.eq.s32.totalorder %s39, 0
      %p418 = por %p416, %p417
      %s419 = ssub.s32 %s42, %s51
      %s420 = ssub.s32 %s40, %s59
      %s421 = sor.u32 %s419, %s420
      %s422 = ssub.s32 %s41, %s55
      %s423 = sor.u32 %s421, %s422
      %p424 = scmp.eq.s32.totalorder %s423, 0
      %s426 = sadd.s32 %s425, 1
      %s427 = scalar_select %p424, %s425, %s426
      %p430 = pneg %p424
      %p431 = scmp.eq.s32.totalorder %s33, 1
      %p432 = por %p430, %p431
      %p433 = scmp.ne.s32.totalorder %s425, %s428
      %p434 = scmp.eq.s32.totalorder %s33, 0
      %p435 = por %p433, %p434
      %p436 = scmp.ne.s32.totalorder %s425, %s428
      %p437 = scmp.eq.s32.totalorder %s38, 1
      %p438 = por %p436, %p437
      %p439 = scmp.ne.s32.totalorder %s428, %s429
      %p440 = scmp.eq.s32.totalorder %s38, 0
      %p441 = por %p439, %p440
      %p442 = scmp.ne.s32.totalorder %s428, %s429
      %p443 = scmp.eq.s32.totalorder %s39, 1
      %p444 = por %p442, %p443
      %p446 = scmp.ne.s32.totalorder %s429, %s445
      %p447 = scmp.eq.s32.totalorder %s39, 0
      %p448 = por %p446, %p447
      %p449 = scmp.le.s32.totalorder 1, %s33
      %p450 = scmp.lt.s32.totalorder %s33, 3
      %p451 = pnand %p449, %p450
      %p452 = pneg %p451
      // Predicated region
      $region9: #{tpu_custom_call.1} parent=5 // pred_check
        _
      $region10: #{tpu_custom_call.1} parent=5 // pred_check_branch
        %454 = sbr.rel (%p451) target = $region12
      $region11: #{tpu_custom_call.1} parent=5 // pred_region
        %s455 = ssub.s32 %s33, 1
        // Predicated region
        $region13: #{tpu_custom_call.1} parent=11 // pred_check
          %p456 = pneg %p159
        $region14: #{tpu_custom_call.1} parent=11 // pred_check_branch
          %458 = sbr.rel (%p456) target = $region16
        $region15: #{tpu_custom_call.1} parent=11 // pred_region
          %s460 = ssub.s32 64, 64
          %461 = vsyncadd [#allocation9], %s460
          %s463 = sshll.u32 [#allocation8], 4
          %s464 = int_to_ptr.vmem [resolvable:$true] %s463
          %466 = dma.hbm_to_vmem [thread:$0]  %s3, 64, %s464, [#allocation9]
        $region16: #{tpu_custom_call.1} parent=11 // pred_fallthru
          _
        // Predicated region
        $region17: #{tpu_custom_call.1} parent=11 // pred_check
          %p467 = pneg %p180
        $region18: #{tpu_custom_call.1} parent=11 // pred_check_branch
          %469 = sbr.rel (%p467) target = $region20
        $region19: #{tpu_custom_call.1} parent=11 // pred_region
          _
        $region20: #{tpu_custom_call.1} parent=11 // pred_fallthru
          _
        // Predicated region
        $region21: #{tpu_custom_call.1} parent=11 // pred_check
          %p470 = pneg %p201
        $region22: #{tpu_custom_call.1} parent=11 // pred_check_branch
          %472 = sbr.rel (%p470) target = $region24
        $region23: #{tpu_custom_call.1} parent=11 // pred_region
          _
        $region24: #{tpu_custom_call.1} parent=11 // pred_fallthru
          _
        // Predicated region
        $region25: #{tpu_custom_call.1} parent=11 // pred_check
          %p473 = pneg %p222
        $region26: #{tpu_custom_call.1} parent=11 // pred_check_branch
          %475 = sbr.rel (%p473) target = $region28
        $region27: #{tpu_custom_call.1} parent=11 // pred_region
          _
        $region28: #{tpu_custom_call.1} parent=11 // pred_fallthru
          _
        // Predicated region
        $region29: #{tpu_custom_call.1} parent=11 // pred_check
          %p476 = pneg %p243
        $region30: #{tpu_custom_call.1} parent=11 // pred_check_branch
          %478 = sbr.rel (%p476) target = $region32
        $region31: #{tpu_custom_call.1} parent=11 // pred_region
          %s480 = ssub.s32 1024, 1024
          %481 = vsyncadd [#allocation9], %s480
          %s482 = sshll.u32 [#allocation10], 4
          %s483 = int_to_ptr.vmem [resolvable:$true] %s482
          %488 = dma.hbm_to_vmem [thread:$0]  %s7, 1024, %s483, [#allocation9], 64, 64, 4
        $region32: #{tpu_custom_call.1} parent=11 // pred_fallthru
          _
        // Predicated region
        $region33: #{tpu_custom_call.1} parent=11 // pred_check
          %p489 = pneg %p264
        $region34: #{tpu_custom_call.1} parent=11 // pred_check_branch
          %491 = sbr.rel (%p489) target = $region36
        $region35: #{tpu_custom_call.1} parent=11 // pred_region
          %s493 = ssub.s32 16, 16
          %494 = vsyncadd [#allocation12], %s493
          %s496 = sshll.u32 [#allocation11], 4
          %s497 = int_to_ptr.vmem [resolvable:$true] %s496
          %499 = dma.hbm_to_vmem [thread:$0]  %s8, 16, %s497, [#allocation12]
        $region36: #{tpu_custom_call.1} parent=11 // pred_fallthru
          _
        // Predicated region
        $region37: #{tpu_custom_call.1} parent=11 // pred_check
          %p500 = pneg %p285
        $region38: #{tpu_custom_call.1} parent=11 // pred_check_branch
          %502 = sbr.rel (%p500) target = $region40
        $region39: #{tpu_custom_call.1} parent=11 // pred_region
          %s504 = ssub.s32 1024, 1024
          %505 = vsyncadd [#allocation12], %s504
          %s506 = sshll.u32 [#allocation13], 4
          %s507 = int_to_ptr.vmem [resolvable:$true] %s506
          %512 = dma.hbm_to_vmem [thread:$0]  %s9, 1024, %s507, [#allocation12], 64, 64, 4
        $region40: #{tpu_custom_call.1} parent=11 // pred_fallthru
          _
        // Predicated region
        $region41: #{tpu_custom_call.1} parent=11 // pred_check
          %p513 = pneg %p306
        $region42: #{tpu_custom_call.1} parent=11 // pred_check_branch
          %515 = sbr.rel (%p513) target = $region44
        $region43: #{tpu_custom_call.1} parent=11 // pred_region
          _
        $region44: #{tpu_custom_call.1} parent=11 // pred_fallthru
          _
        // Predicated region
        $region45: #{tpu_custom_call.1} parent=11 // pred_check
          %p516 = pneg %p327
        $region46: #{tpu_custom_call.1} parent=11 // pred_check_branch
          %518 = sbr.rel (%p516) target = $region48
        $region47: #{tpu_custom_call.1} parent=11 // pred_region
          _
        $region48: #{tpu_custom_call.1} parent=11 // pred_fallthru
          _
        // Predicated region
        $region49: #{tpu_custom_call.1} parent=11 // pred_check
          %p519 = pneg %p348
        $region50: #{tpu_custom_call.1} parent=11 // pred_check_branch
          %521 = sbr.rel (%p519) target = $region52
        $region51: #{tpu_custom_call.1} parent=11 // pred_region
          _
        $region52: #{tpu_custom_call.1} parent=11 // pred_fallthru
          _
        // Predicated region
        $region53: #{tpu_custom_call.1} parent=11 // pred_check
          %p522 = pneg %p369
        $region54: #{tpu_custom_call.1} parent=11 // pred_check_branch
          %524 = sbr.rel (%p522) target = $region56
        $region55: #{tpu_custom_call.1} parent=11 // pred_region
          _
        $region56: #{tpu_custom_call.1} parent=11 // pred_fallthru
          _
        // Predicated region
        $region57: #{tpu_custom_call.1} parent=11 // pred_check
          %p525 = pneg %p390
        $region58: #{tpu_custom_call.1} parent=11 // pred_check_branch
          %527 = sbr.rel (%p525) target = $region60
        $region59: #{tpu_custom_call.1} parent=11 // pred_region
          _
        $region60: #{tpu_custom_call.1} parent=11 // pred_fallthru
          _
        // Predicated region
        $region61: #{tpu_custom_call.1} parent=11 // pred_check
          %p528 = pneg %p411
        $region62: #{tpu_custom_call.1} parent=11 // pred_check_branch
          %530 = sbr.rel (%p528) target = $region64
        $region63: #{tpu_custom_call.1} parent=11 // pred_region
          _
        $region64: #{tpu_custom_call.1} parent=11 // pred_fallthru
          _
      $region12: #{tpu_custom_call.1} parent=5 // pred_fallthru
        _
      %p531 = scmp.lt.s32.totalorder %s33, 2
      // Predicated region
      $region65: #{tpu_custom_call.1} parent=5 // pred_check
        %p532 = pneg %p531
      $region66: #{tpu_custom_call.1} parent=5 // pred_check_branch
        %534 = sbr.rel (%p532) target = $region68
      $region67: #{tpu_custom_call.1} parent=5 // pred_region
        // Predicated region
        $region69: #{tpu_custom_call.1} parent=67 // pred_check
          %p535 = pneg %p74
        $region70: #{tpu_custom_call.1} parent=67 // pred_check_branch
          %537 = sbr.rel (%p535) target = $region72
        $region71: #{tpu_custom_call.1} parent=67 // pred_region
          %s538 = sand.u32 %s64, 1
          %s539 = scalar_lea.sflag [#allocation3], %s538
          %s540 = sand.u32 %s64, 1
          %s541 = smul.addr %s540, 4
          %s542 = scalar_lea.vmem [#allocation2], %s541
          %s544 = ssub.s32 64, 64
          %545 = vsyncadd %s539, %s544
          %s546 = sadd.s32 %s40, %s42
          %s547 = smul.addr %s546, 64
          %s548 = scalar_lea.hbm %s0, %s547
          %s550 = sshll.u32 %s542, 4
          %s551 = int_to_ptr.vmem [resolvable:$true] %s550
          %553 = dma.hbm_to_vmem [thread:$0]  %s548, 64, %s551, %s539
        $region72: #{tpu_custom_call.1} parent=67 // pred_fallthru
          _
        // Predicated region
        $region73: #{tpu_custom_call.1} parent=67 // pred_check
          %p554 = pneg %p102
        $region74: #{tpu_custom_call.1} parent=67 // pred_check_branch
          %556 = sbr.rel (%p554) target = $region76
        $region75: #{tpu_custom_call.1} parent=67 // pred_region
          %s557 = sand.u32 %s33, 1
          %s558 = scalar_lea.sflag [#allocation6], %s557
          %s559 = sand.u32 %s92, 1
          %s560 = smul.addr %s559, 4
          %s561 = scalar_lea.vmem [#allocation5], %s560
          %s563 = ssub.s32 64, 64
          %564 = vsyncadd %s558, %s563
          %s565 = sadd.s32 %s41, %s42
          %s566 = smul.addr %s565, 64
          %s567 = scalar_lea.hbm %s1, %s566
          %s569 = sshll.u32 %s561, 4
          %s570 = int_to_ptr.vmem [resolvable:$true] %s569
          %572 = dma.hbm_to_vmem [thread:$0]  %s567, 64, %s570, %s558
        $region76: #{tpu_custom_call.1} parent=67 // pred_fallthru
          _
        // Predicated region
        $region77: #{tpu_custom_call.1} parent=67 // pred_check
          %p573 = pneg %p132
        $region78: #{tpu_custom_call.1} parent=67 // pred_check_branch
          %575 = sbr.rel (%p573) target = $region80
        $region79: #{tpu_custom_call.1} parent=67 // pred_region
          %s576 = sand.u32 %s33, 1
          %s577 = scalar_lea.sflag [#allocation6], %s576
          %s578 = sand.u32 %s122, 1
          %s579 = smul.addr %s578, 64
          %s580 = scalar_lea.vmem [#allocation7], %s579
          %s581 = smul.u32 8, %s40
          %s583 = ssub.s32 1024, 1024
          %584 = vsyncadd %s577, %s583
          %s585 = sadd.s32 %s41, %s581
          %s586 = smul.addr %s42, 8
          %s587 = sadd.s32 %s585, %s586
          %s588 = smul.addr %s587, 128
          %s589 = scalar_lea.hbm %s2, %s588
          %s590 = sshll.u32 %s580, 4
          %s591 = int_to_ptr.vmem [resolvable:$true] %s590
          %596 = dma.hbm_to_vmem [thread:$0]  %s589, 1024, %s591, %s577, 128, 128, 8
        $region80: #{tpu_custom_call.1} parent=67 // pred_fallthru
          _
      $region68: #{tpu_custom_call.1} parent=5 // pred_fallthru
        _
      %p597 = scmp.le.s32.totalorder 1, %s33
      %p598 = scmp.lt.s32.totalorder %s33, 3
      %p599 = pnand %p597, %p598
      %p600 = pneg %p599
      // Predicated region
      $region81: #{tpu_custom_call.1} parent=5 // pred_check
        _
      $region82: #{tpu_custom_call.1} parent=5 // pred_check_branch
        %602 = sbr.rel (%p599) target = $region84
      $region83: #{tpu_custom_call.1} parent=5 // pred_region
        %s603 = ssub.s32 %s33, 1
        %s604 = sand.u32 %s67, 1
        %s605 = scalar_lea.sflag [#allocation3], %s604
        %s606 = sand.u32 %s67, 1
        %s607 = smul.addr %s606, 4
        %s608 = scalar_lea.vmem [#allocation2], %s607
        // Predicated region
        $region85: #{tpu_custom_call.1} parent=83 // pred_check
          %p609 = pneg %p80
        $region86: #{tpu_custom_call.1} parent=83 // pred_check_branch
          %611 = sbr.rel (%p609) target = $region88
        $region87: #{tpu_custom_call.1} parent=83 // pred_region
          %612 = dma.done %s605, 64
        $region88: #{tpu_custom_call.1} parent=83 // pred_fallthru
          _
        %s613 = sand.u32 %s38, 1
        %s614 = scalar_lea.sflag [#allocation6], %s613
        %s615 = sand.u32 %s95, 1
        %s616 = smul.addr %s615, 4
        %s617 = scalar_lea.vmem [#allocation5], %s616
        // Predicated region
        $region89: #{tpu_custom_call.1} parent=83 // pred_check
          %p618 = pneg %p108
        $region90: #{tpu_custom_call.1} parent=83 // pred_check_branch
          %620 = sbr.rel (%p618) target = $region92
        $region91: #{tpu_custom_call.1} parent=83 // pred_region
          %621 = dma.done %s614, 64
        $region92: #{tpu_custom_call.1} parent=83 // pred_fallthru
          _
        %s622 = sand.u32 %s38, 1
        %s623 = scalar_lea.sflag [#allocation6], %s622
        %s624 = sand.u32 %s125, 1
        %s625 = smul.addr %s624, 64
        %s626 = scalar_lea.vmem [#allocation7], %s625
        // Predicated region
        $region93: #{tpu_custom_call.1} parent=83 // pred_check
          %p627 = pneg %p138
        $region94: #{tpu_custom_call.1} parent=83 // pred_check_branch
          %629 = sbr.rel (%p627) target = $region96
        $region95: #{tpu_custom_call.1} parent=83 // pred_region
          %630 = dma.done %s623, 1024
        $region96: #{tpu_custom_call.1} parent=83 // pred_fallthru
          _
        // Predicated region
        $region97: #{tpu_custom_call.1} parent=83 // pred_check
          %p631 = pneg %p159
        $region98: #{tpu_custom_call.1} parent=83 // pred_check_branch
          %633 = sbr.rel (%p631) target = $region100
        $region99: #{tpu_custom_call.1} parent=83 // pred_region
          %634 = dma.done [#allocation9], 64
        $region100: #{tpu_custom_call.1} parent=83 // pred_fallthru
          _
        // Predicated region
        $region101: #{tpu_custom_call.1} parent=83 // pred_check
          %p635 = pneg %p243
        $region102: #{tpu_custom_call.1} parent=83 // pred_check_branch
          %637 = sbr.rel (%p635) target = $region104
        $region103: #{tpu_custom_call.1} parent=83 // pred_region
          %638 = dma.done [#allocation9], 1024
        $region104: #{tpu_custom_call.1} parent=83 // pred_fallthru
          _
        // Predicated region
        $region105: #{tpu_custom_call.1} parent=83 // pred_check
          %p639 = pneg %p264
        $region106: #{tpu_custom_call.1} parent=83 // pred_check_branch
          %641 = sbr.rel (%p639) target = $region108
        $region107: #{tpu_custom_call.1} parent=83 // pred_region
          %642 = dma.done [#allocation12], 16
        $region108: #{tpu_custom_call.1} parent=83 // pred_fallthru
          _
        // Predicated region
        $region109: #{tpu_custom_call.1} parent=83 // pred_check
          %p643 = pneg %p285
        $region110: #{tpu_custom_call.1} parent=83 // pred_check_branch
          %645 = sbr.rel (%p643) target = $region112
        $region111: #{tpu_custom_call.1} parent=83 // pred_region
          %646 = dma.done [#allocation12], 1024
        $region112: #{tpu_custom_call.1} parent=83 // pred_fallthru
          _
        %s647 = sand.u32 %s67, 1
        %s648 = scalar_lea.sflag [#allocation3], %s647
        %s649 = sand.u32 %s67, 1
        %s650 = smul.addr %s649, 4
        %s651 = scalar_lea.vmem [#allocation2], %s650
        %p652 = pneg %p80
        %p653 = pneg %p77
        %s654 = sand.u32 %s38, 1
        %s655 = scalar_lea.sflag [#allocation6], %s654
        %s656 = sand.u32 %s95, 1
        %s657 = smul.addr %s656, 4
        %s658 = scalar_lea.vmem [#allocation5], %s657
        %p659 = pneg %p108
        %p660 = pneg %p105
        %s661 = sand.u32 %s38, 1
        %s662 = scalar_lea.sflag [#allocation6], %s661
        %s663 = sand.u32 %s125, 1
        %s664 = smul.addr %s663, 64
        %s665 = scalar_lea.vmem [#allocation7], %s664
        %p666 = pneg %p138
        %p667 = pneg %p135
        %p668 = pneg %p159
        %p669 = pneg %p156
        %p670 = pneg %p180
        %p671 = pneg %p177
        %p672 = pneg %p201
        %p673 = pneg %p198
        %p674 = pneg %p222
        %p675 = pneg %p219
        %p676 = pneg %p243
        %p677 = pneg %p240
        %p678 = pneg %p264
        %p679 = pneg %p261
        %p680 = pneg %p285
        %p681 = pneg %p282
        %p682 = pneg %p306
        %p683 = pneg %p303
        %p684 = pneg %p327
        %p685 = pneg %p324
        %p686 = pneg %p348
        %p687 = pneg %p345
        %p688 = pneg %p369
        %p689 = pneg %p366
        %p690 = pneg %p390
        %p691 = pneg %p387
        %p692 = pneg %p411
        %p693 = pneg %p408
        %p694 = pneg %p441
        %p695 = pneg %p438
        %s696 = sand.u32 %s428, 1
        %s697 = scalar_lea.sflag [#allocation4], %s696
        %s698 = sand.u32 %s428, 1
        %s699 = smul.addr %s698, 64
        %s700 = scalar_lea.vmem [#allocation14], %s699
        %s701 = smul.u32 8, %s43
        %s702 = smul.u32 8, %s43
        %v704 = vld [vmem:[%s617] sm:$0xf]
        %v705 = vld [vmem:[%s5] sm:$0xf]
        %v706 = vld [vmem:[%s5 + $0x4] sm:$0xf]
        %v709 = vunpack.c.l.b16 %v705
        %v710 = vunpack.c.l.b16 %v706
        %v711 = vpack.c.b16 %v710, %v709
        %vm713 = vcmask 130048
        %v715 = vsel %vm713, %v704, 0
        %717 = vmatprep.subr.bf16.mxu0 0
        %718 = vmatpush1.bf16.msra.mxu0 %v711
        %719 = vmatprep.subr.bf16.mxu0 0
        %720 = vmatpush1.bf16.msra.mxu0 0
        %721 = vmatprep.subr.bf16.mxu0 0
        %722 = vmatpush1.bf16.msra.mxu0 0
        %723 = vmatprep.subr.bf16.mxu0 0
        %724 = vmatpush1.bf16.msra.mxu0 0
        %725 = vmatprep.subr.bf16.mxu0 0
        %726 = vmatpush1.bf16.msra.mxu0 0
        %727 = vmatprep.subr.bf16.mxu0 0
        %728 = vmatpush1.bf16.msra.mxu0 0
        %729 = vmatprep.subr.bf16.mxu0 0
        %730 = vmatpush1.bf16.msra.mxu0 0
        %731 = vmatprep.subr.bf16.mxu0 0
        %732 = vmatpush1.bf16.msra.mxu0 0
        %733 = vmatprep.subr.bf16.mxu0 0
        %734 = vmatpush1.bf16.msra.mxu0 0
        %735 = vmatprep.subr.bf16.mxu0 0
        %736 = vmatpush1.bf16.msra.mxu0 0
        %737 = vmatprep.subr.bf16.mxu0 0
        %738 = vmatpush1.bf16.msra.mxu0 0
        %739 = vmatprep.subr.bf16.mxu0 0
        %740 = vmatpush1.bf16.msra.mxu0 0
        %741 = vmatprep.subr.bf16.mxu0 0
        %742 = vmatpush1.bf16.msra.mxu0 0
        %743 = vmatprep.subr.bf16.mxu0 0
        %744 = vmatpush1.bf16.msra.mxu0 0
        %745 = vmatprep.subr.bf16.mxu0 0
        %746 = vmatpush1.bf16.msra.mxu0 0
        %747 = vmatprep.subr.bf16.mxu0 0
        %748 = vmatpush1.bf16.msra.mxu0 0
        %749 = vmatprep.mubr.bf16.mxu0 0
        %750 = vmatmul.mubr.bf16.gmra.mrb[0].mxu0 %v715
        %v751 = vpop.f32.mrb[0].mxu0
        %v752 = vadd.f32 0.0, %v751
        %v753 = vpop.f32.mrb[0].mxu0
        %v754 = vpop.f32.mrb[0].mxu0
        %v755 = vpop.f32.mrb[0].mxu0
        %756 = vdwg.mxu0
        %v757 = vld [vmem:[%s12] sm:$0xf]
        %v758 = vld [vmem:[%s12 + $0x4] sm:$0xf]
        %v761 = vunpack.c.l.b16 %v757
        %v762 = vunpack.c.l.b16 %v758
        %v763 = vpack.c.b16 %v762, %v761
        %765 = vmatprep.subr.bf16.mxu0 0
        %766 = vmatpush1.bf16.msra.mxu0 %v763
        %767 = vmatprep.subr.bf16.mxu0 0
        %768 = vmatpush1.bf16.msra.mxu0 0
        %769 = vmatprep.subr.bf16.mxu0 0
        %770 = vmatpush1.bf16.msra.mxu0 0
        %771 = vmatprep.subr.bf16.mxu0 0
        %772 = vmatpush1.bf16.msra.mxu0 0
        %773 = vmatprep.subr.bf16.mxu0 0
        %774 = vmatpush1.bf16.msra.mxu0 0
        %775 = vmatprep.subr.bf16.mxu0 0
        %776 = vmatpush1.bf16.msra.mxu0 0
        %777 = vmatprep.subr.bf16.mxu0 0
        %778 = vmatpush1.bf16.msra.mxu0 0
        %779 = vmatprep.subr.bf16.mxu0 0
        %780 = vmatpush1.bf16.msra.mxu0 0
        %781 = vmatprep.subr.bf16.mxu0 0
        %782 = vmatpush1.bf16.msra.mxu0 0
        %783 = vmatprep.subr.bf16.mxu0 0
        %784 = vmatpush1.bf16.msra.mxu0 0
        %785 = vmatprep.subr.bf16.mxu0 0
        %786 = vmatpush1.bf16.msra.mxu0 0
        %787 = vmatprep.subr.bf16.mxu0 0
        %788 = vmatpush1.bf16.msra.mxu0 0
        %789 = vmatprep.subr.bf16.mxu0 0
        %790 = vmatpush1.bf16.msra.mxu0 0
        %791 = vmatprep.subr.bf16.mxu0 0
        %792 = vmatpush1.bf16.msra.mxu0 0
        %793 = vmatprep.subr.bf16.mxu0 0
        %794 = vmatpush1.bf16.msra.mxu0 0
        %795 = vmatprep.subr.bf16.mxu0 0
        %796 = vmatpush1.bf16.msra.mxu0 0
        %797 = vmatprep.mubr.bf16.mxu0 0
        %798 = vmatmul.mubr.bf16.gmra.mrb[0].mxu0 %v715
        %v799 = vpop.f32.mrb[0].mxu0
        %v800 = vadd.f32 0.0, %v799
        %v801 = vpop.f32.mrb[0].mxu0
        %v802 = vpop.f32.mrb[0].mxu0
        %v803 = vpop.f32.mrb[0].mxu0
        %804 = vdwg.mxu0
        %v805 = vld [vmem:[%s608] sm:$0xf]
        %v806 = vld [vmem:[%s626] sm:$0xff]
        %v807 = vld [vmem:[%s626 + $0x8] sm:$0xff]
        %v808 = vld [vmem:[%s626 + $0x10] sm:$0xff]
        %v809 = vld [vmem:[%s626 + $0x18] sm:$0xff]
        %v810 = vld [vmem:[%s626 + $0x20] sm:$0xff]
        %v811 = vld [vmem:[%s626 + $0x28] sm:$0xff]
        %v812 = vld [vmem:[%s626 + $0x30] sm:$0xff]
        %v813 = vld [vmem:[%s626 + $0x38] sm:$0xff]
        %v814 = vpack.c.bf16 %v807, %v806
        %v815 = vpack.c.bf16 %v809, %v808
        %v816 = vpack.c.bf16 %v811, %v810
        %v817 = vpack.c.bf16 %v813, %v812
        %v818 = vld [vmem:[%s4] sm:$0xf]
        %v819 = vld [vmem:[%s4 + $0x4] sm:$0xf]
        %v820 = vld [vmem:[%s6] sm:$0x1]
        %v822 = vlaneseq
        %v823 = vshrl.u32 %v822, 7
        %v824 = vsub.s32 0, %v823
        %v825 = vrot.slane %v820, %v824
        %v829 = vunpack.c.l.b16 %v818
        %v830 = vunpack.c.l.b16 %v819
        %v831 = vpack.c.b16 %v830, %v829
        %v834 = vsel %vm713, %v805, 0
        %836 = vmatprep.subr.bf16.mxu0 0
        %837 = vmatpush1.bf16.msra.mxu0 %v831
        %838 = vmatprep.subr.bf16.mxu0 0
        %839 = vmatpush1.bf16.msra.mxu0 0
        %840 = vmatprep.subr.bf16.mxu0 0
        %841 = vmatpush1.bf16.msra.mxu0 0
        %842 = vmatprep.subr.bf16.mxu0 0
        %843 = vmatpush1.bf16.msra.mxu0 0
        %844 = vmatprep.subr.bf16.mxu0 0
        %845 = vmatpush1.bf16.msra.mxu0 0
        %846 = vmatprep.subr.bf16.mxu0 0
        %847 = vmatpush1.bf16.msra.mxu0 0
        %848 = vmatprep.subr.bf16.mxu0 0
        %849 = vmatpush1.bf16.msra.mxu0 0
        %850 = vmatprep.subr.bf16.mxu0 0
        %851 = vmatpush1.bf16.msra.mxu0 0
        %852 = vmatprep.subr.bf16.mxu0 0
        %853 = vmatpush1.bf16.msra.mxu0 0
        %854 = vmatprep.subr.bf16.mxu0 0
        %855 = vmatpush1.bf16.msra.mxu0 0
        %856 = vmatprep.subr.bf16.mxu0 0
        %857 = vmatpush1.bf16.msra.mxu0 0
        %858 = vmatprep.subr.bf16.mxu0 0
        %859 = vmatpush1.bf16.msra.mxu0 0
        %860 = vmatprep.subr.bf16.mxu0 0
        %861 = vmatpush1.bf16.msra.mxu0 0
        %862 = vmatprep.subr.bf16.mxu0 0
        %863 = vmatpush1.bf16.msra.mxu0 0
        %864 = vmatprep.subr.bf16.mxu0 0
        %865 = vmatpush1.bf16.msra.mxu0 0
        %866 = vmatprep.subr.bf16.mxu0 0
        %867 = vmatpush1.bf16.msra.mxu0 0
        %868 = vmatprep.mubr.bf16.mxu0 0
        %869 = vmatmul.mubr.bf16.gmra.mrb[0].mxu0 %v834
        %v870 = vpop.f32.mrb[0].mxu0
        %v871 = vadd.f32 %v825, %v870
        %v872 = vpop.f32.mrb[0].mxu0
        %v873 = vpop.f32.mrb[0].mxu0
        %v874 = vpop.f32.mrb[0].mxu0
        %875 = vdwg.mxu0
        %v876 = vld [vmem:[#allocation8] sm:$0xf]
        %vm877 = vcmask 64512
        %v879 = vsel %vm877, %v814, 0
        %v882 = vsel %vm877, %v815, 0
        %v885 = vsel %vm877, %v816, 0
        %v888 = vsel %vm877, %v817, 0
        %vm890 = vcmask 1043456
        %v892 = vsel %vm890, %v876, 0
        %894 = vmatprep.subr.bf16.mxu0 0
        %895 = vmatpush1.bf16.msra.mxu0 %v892
        %896 = vmatprep.subr.bf16.mxu0 0
        %897 = vmatpush1.bf16.msra.mxu0 0
        %898 = vmatprep.subr.bf16.mxu0 0
        %899 = vmatpush1.bf16.msra.mxu0 0
        %900 = vmatprep.subr.bf16.mxu0 0
        %901 = vmatpush1.bf16.msra.mxu0 0
        %902 = vmatprep.subr.bf16.mxu0 0
        %903 = vmatpush1.bf16.msra.mxu0 0
        %904 = vmatprep.subr.bf16.mxu0 0
        %905 = vmatpush1.bf16.msra.mxu0 0
        %906 = vmatprep.subr.bf16.mxu0 0
        %907 = vmatpush1.bf16.msra.mxu0 0
        %908 = vmatprep.subr.bf16.mxu0 0
        %909 = vmatpush1.bf16.msra.mxu0 0
        %910 = vmatprep.subr.bf16.mxu0 0
        %911 = vmatpush1.bf16.msra.mxu0 0
        %912 = vmatprep.subr.bf16.mxu0 0
        %913 = vmatpush1.bf16.msra.mxu0 0
        %914 = vmatprep.subr.bf16.mxu0 0
        %915 = vmatpush1.bf16.msra.mxu0 0
        %916 = vmatprep.subr.bf16.mxu0 0
        %917 = vmatpush1.bf16.msra.mxu0 0
        %918 = vmatprep.subr.bf16.mxu0 0
        %919 = vmatpush1.bf16.msra.mxu0 0
        %920 = vmatprep.subr.bf16.mxu0 0
        %921 = vmatpush1.bf16.msra.mxu0 0
        %922 = vmatprep.subr.bf16.mxu0 0
        %923 = vmatpush1.bf16.msra.mxu0 0
        %924 = vmatprep.subr.bf16.mxu0 0
        %925 = vmatpush1.bf16.msra.mxu0 0
        %926 = vmatprep.mubr.bf16.mxu0 0
        %927 = vmatmul.mubr.bf16.gmra.mrb[0].mxu0 %v879
        %v928 = vpop.f32.mrb[0].mxu0
        %v929 = vadd.f32 0.0, %v928
        %v930 = vpop.f32.mrb[0].mxu0
        %v931 = vpop.f32.mrb[0].mxu0
        %v932 = vadd.f32 0.0, %v931
        %v933 = vpop.f32.mrb[0].mxu0
        %934 = vmatprep.mubr.bf16.mxu0 0
        %935 = vmatmul.mubr.bf16.gmra.mrb[0].mxu0 %v882
        %v936 = vpop.f32.mrb[0].mxu0
        %v937 = vadd.f32 0.0, %v936
        %v938 = vpop.f32.mrb[0].mxu0
        %v939 = vpop.f32.mrb[0].mxu0
        %v940 = vadd.f32 0.0, %v939
        %v941 = vpop.f32.mrb[0].mxu0
        %942 = vmatprep.mubr.bf16.mxu0 0
        %943 = vmatmul.mubr.bf16.gmra.mrb[0].mxu0 %v885
        %v944 = vpop.f32.mrb[0].mxu0
        %v945 = vadd.f32 0.0, %v944
        %v946 = vpop.f32.mrb[0].mxu0
        %v947 = vpop.f32.mrb[0].mxu0
        %v948 = vadd.f32 0.0, %v947
        %v949 = vpop.f32.mrb[0].mxu0
        %950 = vmatprep.mubr.bf16.mxu0 0
        %951 = vmatmul.mubr.bf16.gmra.mrb[0].mxu0 %v888
        %v952 = vpop.f32.mrb[0].mxu0
        %v953 = vadd.f32 0.0, %v952
        %v954 = vpop.f32.mrb[0].mxu0
        %v955 = vpop.f32.mrb[0].mxu0
        %v956 = vadd.f32 0.0, %v955
        %v957 = vpop.f32.mrb[0].mxu0
        %958 = vdwg.mxu0
        %v960 = vcombine.high %v871, %v871
        %v962 = vunpack.c.l.s4 1966171168
        %v963 = vunpack.c.0.s8 %v962
        %v964 = vlaneseq
        %v965 = vshrl.u32 %v964, 7
        %v966 = vsub.s32 %v963, %v965
        %v967 = vrot.slane %v871, %v966
        %v969 = vunpack.c.l.s4 1966171168
        %v970 = vunpack.c.0.s8 %v969
        %v971 = vlaneseq
        %v972 = vshrl.u32 %v971, 7
        %v973 = vsub.s32 %v970, %v972
        %v974 = vrot.slane %v960, %v973
        %v975 = vcombine.high %v967, %v967
        %v976 = vcombine.high %v974, %v974
        %v978 = vunpack.c.l.s4 1966171168
        %v979 = vunpack.c.0.s8 %v978
        %v980 = vlaneseq
        %v981 = vshrl.u32 %v980, 7
        %v982 = vsub.s32 %v979, %v981
        %v983 = vrot.slane %v967, %v982
        %v985 = vunpack.c.l.s4 1966171168
        %v986 = vunpack.c.0.s8 %v985
        %v987 = vlaneseq
        %v988 = vshrl.u32 %v987, 7
        %v989 = vsub.s32 %v986, %v988
        %v990 = vrot.slane %v974, %v989
        %v992 = vunpack.c.l.s4 1966171168
        %v993 = vunpack.c.0.s8 %v992
        %v994 = vlaneseq
        %v995 = vshrl.u32 %v994, 7
        %v996 = vsub.s32 %v993, %v995
        %v997 = vrot.slane %v975, %v996
        %v999 = vunpack.c.l.s4 1966171168
        %v1000 = vunpack.c.0.s8 %v999
        %v1001 = vlaneseq
        %v1002 = vshrl.u32 %v1001, 7
        %v1003 = vsub.s32 %v1000, %v1002
        %v1004 = vrot.slane %v976, %v1003
        %v1005 = vcombine.high %v983, %v983
        %v1006 = vcombine.high %v990, %v990
        %v1007 = vcombine.high %v997, %v997
        %v1008 = vcombine.high %v1004, %v1004
        %v1009 = vlaneseq
        %v1010 = vshrl.u32 %v1009, 7
        %v1011 = vsub.s32 0, %v1010
        %v1012 = vrot.slane %v983, %v1011
        %v1013 = vlaneseq
        %v1014 = vshrl.u32 %v1013, 7
        %v1015 = vsub.s32 0, %v1014
        %v1016 = vrot.slane %v997, %v1015
        %v1017 = vlaneseq
        %v1018 = vshrl.u32 %v1017, 7
        %v1019 = vsub.s32 0, %v1018
        %v1020 = vrot.slane %v1005, %v1019
        %v1021 = vlaneseq
        %v1022 = vshrl.u32 %v1021, 7
        %v1023 = vsub.s32 0, %v1022
        %v1024 = vrot.slane %v1007, %v1023
        %v1025 = vlaneseq
        %v1026 = vshrl.u32 %v1025, 7
        %v1027 = vsub.s32 0, %v1026
        %v1028 = vrot.slane %v990, %v1027
        %v1029 = vlaneseq
        %v1030 = vshrl.u32 %v1029, 7
        %v1031 = vsub.s32 0, %v1030
        %v1032 = vrot.slane %v1004, %v1031
        %v1033 = vlaneseq
        %v1034 = vshrl.u32 %v1033, 7
        %v1035 = vsub.s32 0, %v1034
        %v1036 = vrot.slane %v1006, %v1035
        %v1037 = vlaneseq
        %v1038 = vshrl.u32 %v1037, 7
        %v1039 = vsub.s32 0, %v1038
        %v1040 = vrot.slane %v1008, %v1039
        %v1049 = vadd.f32 %v929, %v1012
        %v1050 = vadd.f32 %v932, %v1016
        %v1051 = vadd.f32 %v937, %v1020
        %v1052 = vadd.f32 %v940, %v1024
        %v1053 = vadd.f32 %v945, %v1028
        %v1054 = vadd.f32 %v948, %v1032
        %v1055 = vadd.f32 %v953, %v1036
        %v1056 = vadd.f32 %v956, %v1040
        %v1057 = vadd.f32 %v1049, %v752
        %v1058 = vadd.f32 %v1050, %v752
        %v1059 = vadd.f32 %v1051, %v752
        %v1060 = vadd.f32 %v1052, %v752
        %v1061 = vadd.f32 %v1053, %v752
        %v1062 = vadd.f32 %v1054, %v752
        %v1063 = vadd.f32 %v1055, %v752
        %v1064 = vadd.f32 %v1056, %v752
        %v1065 = vmax.f32 %v1057, 0.0
        %v1066 = vmax.f32 %v1058, 0.0
        %v1067 = vmax.f32 %v1059, 0.0
        %v1068 = vmax.f32 %v1060, 0.0
        %v1069 = vmax.f32 %v1061, 0.0
        %v1070 = vmax.f32 %v1062, 0.0
        %v1071 = vmax.f32 %v1063, 0.0
        %v1072 = vmax.f32 %v1064, 0.0
        %v1073 = vpack.c.bf16 %v1066, %v1065
        %v1074 = vpack.c.bf16 %v1068, %v1067
        %v1075 = vpack.c.bf16 %v1070, %v1069
        %v1076 = vpack.c.bf16 %v1072, %v1071
        %v1077 = vld [vmem:[#allocation10] sm:$0xf]
        %v1078 = vld [vmem:[#allocation10 + $0x4] sm:$0xf]
        %v1079 = vld [vmem:[#allocation10 + $0x8] sm:$0xf]
        %v1080 = vld [vmem:[#allocation10 + $0xc] sm:$0xf]
        %v1081 = vld [vmem:[#allocation10 + $0x10] sm:$0xf]
        %v1082 = vld [vmem:[#allocation10 + $0x14] sm:$0xf]
        %v1083 = vld [vmem:[#allocation10 + $0x18] sm:$0xf]
        %v1084 = vld [vmem:[#allocation10 + $0x1c] sm:$0xf]
        %v1085 = vld [vmem:[#allocation10 + $0x20] sm:$0xf]
        %v1086 = vld [vmem:[#allocation10 + $0x24] sm:$0xf]
        %v1087 = vld [vmem:[#allocation10 + $0x28] sm:$0xf]
        %v1088 = vld [vmem:[#allocation10 + $0x2c] sm:$0xf]
        %v1089 = vld [vmem:[#allocation10 + $0x30] sm:$0xf]
        %v1090 = vld [vmem:[#allocation10 + $0x34] sm:$0xf]
        %v1091 = vld [vmem:[#allocation10 + $0x38] sm:$0xf]
        %v1092 = vld [vmem:[#allocation10 + $0x3c] sm:$0xf]
        %v1093 = vld [vmem:[#allocation11] sm:$0x1]
        %v1095 = vlaneseq
        %v1096 = vshrl.u32 %v1095, 7
        %v1097 = vsub.s32 0, %v1096
        %v1098 = vrot.slane %v1093, %v1097
        %v1116 = vunpack.c.l.b16 %v1077
        %v1117 = vunpack.c.l.b16 %v1078
        %v1118 = vunpack.c.l.b16 %v1079
        %v1119 = vunpack.c.l.b16 %v1080
        %v1120 = vunpack.c.l.b16 %v1081
        %v1121 = vunpack.c.l.b16 %v1082
        %v1122 = vunpack.c.l.b16 %v1083
        %v1123 = vunpack.c.l.b16 %v1084
        %v1124 = vunpack.c.l.b16 %v1085
        %v1125 = vunpack.c.l.b16 %v1086
        %v1126 = vunpack.c.l.b16 %v1087
        %v1127 = vunpack.c.l.b16 %v1088
        %v1128 = vunpack.c.l.b16 %v1089
        %v1129 = vunpack.c.l.b16 %v1090
        %v1130 = vunpack.c.l.b16 %v1091
        %v1131 = vunpack.c.l.b16 %v1092
        %v1132 = vpack.c.b16 %v1117, %v1116
        %v1133 = vpack.c.b16 %v1119, %v1118
        %v1134 = vpack.c.b16 %v1121, %v1120
        %v1135 = vpack.c.b16 %v1123, %v1122
        %v1136 = vpack.c.b16 %v1125, %v1124
        %v1137 = vpack.c.b16 %v1127, %v1126
        %v1138 = vpack.c.b16 %v1129, %v1128
        %v1139 = vpack.c.b16 %v1131, %v1130
        %1148 = vmatprep.subr.bf16.mxu0 0
        %1149 = vmatpush1.bf16.msra.mxu0 %v1132
        %1150 = vmatprep.subr.bf16.mxu0 0
        %1151 = vmatpush1.bf16.msra.mxu0 %v1133
        %1152 = vmatprep.subr.bf16.mxu0 0
        %1153 = vmatpush1.bf16.msra.mxu0 %v1134
        %1154 = vmatprep.subr.bf16.mxu0 0
        %1155 = vmatpush1.bf16.msra.mxu0 %v1135
        %1156 = vmatprep.subr.bf16.mxu0 0
        %1157 = vmatpush1.bf16.msra.mxu0 %v1136
        %1158 = vmatprep.subr.bf16.mxu0 0
        %1159 = vmatpush1.bf16.msra.mxu0 %v1137
        %1160 = vmatprep.subr.bf16.mxu0 0
        %1161 = vmatpush1.bf16.msra.mxu0 %v1138
        %1162 = vmatprep.subr.bf16.mxu0 0
        %1163 = vmatpush1.bf16.msra.mxu0 %v1139
        %1164 = vmatprep.subr.bf16.mxu0 0
        %1165 = vmatpush1.bf16.msra.mxu0 0
        %1166 = vmatprep.subr.bf16.mxu0 0
        %1167 = vmatpush1.bf16.msra.mxu0 0
        %1168 = vmatprep.subr.bf16.mxu0 0
        %1169 = vmatpush1.bf16.msra.mxu0 0
        %1170 = vmatprep.subr.bf16.mxu0 0
        %1171 = vmatpush1.bf16.msra.mxu0 0
        %1172 = vmatprep.subr.bf16.mxu0 0
        %1173 = vmatpush1.bf16.msra.mxu0 0
        %1174 = vmatprep.subr.bf16.mxu0 0
        %1175 = vmatpush1.bf16.msra.mxu0 0
        %1176 = vmatprep.subr.bf16.mxu0 0
        %1177 = vmatpush1.bf16.msra.mxu0 0
        %1178 = vmatprep.subr.bf16.mxu0 0
        %1179 = vmatpush1.bf16.msra.mxu0 0
        %1180 = vmatprep.mubr.bf16.mxu0 0
        %1181 = vmatmul.mubr.bf16.gmra.mrb[0].mxu0 %v1073
        %v1182 = vpop.f32.mrb[0].mxu0
        %v1183 = vadd.f32 %v1098, %v1182
        %v1184 = vpop.f32.mrb[0].mxu0
        %v1185 = vpop.f32.mrb[0].mxu0
        %v1186 = vadd.f32 %v1098, %v1185
        %v1187 = vpop.f32.mrb[0].mxu0
        %1188 = vmatprep.mubr.bf16.mxu0 0
        %1189 = vmatmul.mubr.bf16.gmra.mrb[0].mxu0 %v1074
        %v1190 = vpop.f32.mrb[0].mxu0
        %v1191 = vadd.f32 %v1098, %v1190
        %v1192 = vpop.f32.mrb[0].mxu0
        %v1193 = vpop.f32.mrb[0].mxu0
        %v1194 = vadd.f32 %v1098, %v1193
        %v1195 = vpop.f32.mrb[0].mxu0
        %1196 = vmatprep.mubr.bf16.mxu0 0
        %1197 = vmatmul.mubr.bf16.gmra.mrb[0].mxu0 %v1075
        %v1198 = vpop.f32.mrb[0].mxu0
        %v1199 = vadd.f32 %v1098, %v1198
        %v1200 = vpop.f32.mrb[0].mxu0
        %v1201 = vpop.f32.mrb[0].mxu0
        %v1202 = vadd.f32 %v1098, %v1201
        %v1203 = vpop.f32.mrb[0].mxu0
        %1204 = vmatprep.mubr.bf16.mxu0 0
        %1205 = vmatmul.mubr.bf16.gmra.mrb[0].mxu0 %v1076
        %v1206 = vpop.f32.mrb[0].mxu0
        %v1207 = vadd.f32 %v1098, %v1206
        %v1208 = vpop.f32.mrb[0].mxu0
        %v1209 = vpop.f32.mrb[0].mxu0
        %v1210 = vadd.f32 %v1098, %v1209
        %v1211 = vpop.f32.mrb[0].mxu0
        %1212 = vdwg.mxu0
        %v1213 = vmax.f32 %v1183, 0.0
        %v1214 = vmax.f32 %v1186, 0.0
        %v1215 = vmax.f32 %v1191, 0.0
        %v1216 = vmax.f32 %v1194, 0.0
        %v1217 = vmax.f32 %v1199, 0.0
        %v1218 = vmax.f32 %v1202, 0.0
        %v1219 = vmax.f32 %v1207, 0.0
        %v1220 = vmax.f32 %v1210, 0.0
        %v1221 = vpack.c.bf16 %v1214, %v1213
        %v1222 = vpack.c.bf16 %v1216, %v1215
        %v1223 = vpack.c.bf16 %v1218, %v1217
        %v1224 = vpack.c.bf16 %v1220, %v1219
        %v1225 = vld [vmem:[%s11] sm:$0xf]
        %v1226 = vld [vmem:[%s11 + $0x4] sm:$0xf]
        %v1227 = vld [vmem:[%s13] sm:$0x1]
        %v1229 = vlaneseq
        %v1230 = vshrl.u32 %v1229, 7
        %v1231 = vsub.s32 0, %v1230
        %v1232 = vrot.slane %v1227, %v1231
        %v1236 = vunpack.c.l.b16 %v1225
        %v1237 = vunpack.c.l.b16 %v1226
        %v1238 = vpack.c.b16 %v1237, %v1236
        %1240 = vmatprep.subr.bf16.mxu0 0
        %1241 = vmatpush1.bf16.msra.mxu0 %v1238
        %1242 = vmatprep.subr.bf16.mxu0 0
        %1243 = vmatpush1.bf16.msra.mxu0 0
        %1244 = vmatprep.subr.bf16.mxu0 0
        %1245 = vmatpush1.bf16.msra.mxu0 0
        %1246 = vmatprep.subr.bf16.mxu0 0
        %1247 = vmatpush1.bf16.msra.mxu0 0
        %1248 = vmatprep.subr.bf16.mxu0 0
        %1249 = vmatpush1.bf16.msra.mxu0 0
        %1250 = vmatprep.subr.bf16.mxu0 0
        %1251 = vmatpush1.bf16.msra.mxu0 0
        %1252 = vmatprep.subr.bf16.mxu0 0
        %1253 = vmatpush1.bf16.msra.mxu0 0
        %1254 = vmatprep.subr.bf16.mxu0 0
        %1255 = vmatpush1.bf16.msra.mxu0 0
        %1256 = vmatprep.subr.bf16.mxu0 0
        %1257 = vmatpush1.bf16.msra.mxu0 0
        %1258 = vmatprep.subr.bf16.mxu0 0
        %1259 = vmatpush1.bf16.msra.mxu0 0
        %1260 = vmatprep.subr.bf16.mxu0 0
        %1261 = vmatpush1.bf16.msra.mxu0 0
        %1262 = vmatprep.subr.bf16.mxu0 0
        %1263 = vmatpush1.bf16.msra.mxu0 0
        %1264 = vmatprep.subr.bf16.mxu0 0
        %1265 = vmatpush1.bf16.msra.mxu0 0
        %1266 = vmatprep.subr.bf16.mxu0 0
        %1267 = vmatpush1.bf16.msra.mxu0 0
        %1268 = vmatprep.subr.bf16.mxu0 0
        %1269 = vmatpush1.bf16.msra.mxu0 0
        %1270 = vmatprep.subr.bf16.mxu0 0
        %1271 = vmatpush1.bf16.msra.mxu0 0
        %1272 = vmatprep.mubr.bf16.mxu0 0
        %1273 = vmatmul.mubr.bf16.gmra.mrb[0].mxu0 %v834
        %v1274 = vpop.f32.mrb[0].mxu0
        %v1275 = vadd.f32 %v1232, %v1274
        %v1276 = vpop.f32.mrb[0].mxu0
        %v1277 = vpop.f32.mrb[0].mxu0
        %v1278 = vpop.f32.mrb[0].mxu0
        %1279 = vdwg.mxu0
        %v1280 = vld [vmem:[#allocation13] sm:$0xf]
        %v1281 = vld [vmem:[#allocation13 + $0x4] sm:$0xf]
        %v1282 = vld [vmem:[#allocation13 + $0x8] sm:$0xf]
        %v1283 = vld [vmem:[#allocation13 + $0xc] sm:$0xf]
        %v1284 = vld [vmem:[#allocation13 + $0x10] sm:$0xf]
        %v1285 = vld [vmem:[#allocation13 + $0x14] sm:$0xf]
        %v1286 = vld [vmem:[#allocation13 + $0x18] sm:$0xf]
        %v1287 = vld [vmem:[#allocation13 + $0x1c] sm:$0xf]
        %v1288 = vld [vmem:[#allocation13 + $0x20] sm:$0xf]
        %v1289 = vld [vmem:[#allocation13 + $0x24] sm:$0xf]
        %v1290 = vld [vmem:[#allocation13 + $0x28] sm:$0xf]
        %v1291 = vld [vmem:[#allocation13 + $0x2c] sm:$0xf]
        %v1292 = vld [vmem:[#allocation13 + $0x30] sm:$0xf]
        %v1293 = vld [vmem:[#allocation13 + $0x34] sm:$0xf]
        %v1294 = vld [vmem:[#allocation13 + $0x38] sm:$0xf]
        %v1295 = vld [vmem:[#allocation13 + $0x3c] sm:$0xf]
        %v1296 = vld [vmem:[%s10] sm:$0xf]
        %v1298 = vsel %vm890, %v1296, 0
        %1300 = vmatprep.subr.bf16.mxu0 0
        %1301 = vmatpush1.bf16.msra.mxu0 %v1298
        %1302 = vmatprep.subr.bf16.mxu0 0
        %1303 = vmatpush1.bf16.msra.mxu0 0
        %1304 = vmatprep.subr.bf16.mxu0 0
        %1305 = vmatpush1.bf16.msra.mxu0 0
        %1306 = vmatprep.subr.bf16.mxu0 0
        %1307 = vmatpush1.bf16.msra.mxu0 0
        %1308 = vmatprep.subr.bf16.mxu0 0
        %1309 = vmatpush1.bf16.msra.mxu0 0
        %1310 = vmatprep.subr.bf16.mxu0 0
        %1311 = vmatpush1.bf16.msra.mxu0 0
        %1312 = vmatprep.subr.bf16.mxu0 0
        %1313 = vmatpush1.bf16.msra.mxu0 0
        %1314 = vmatprep.subr.bf16.mxu0 0
        %1315 = vmatpush1.bf16.msra.mxu0 0
        %1316 = vmatprep.subr.bf16.mxu0 0
        %1317 = vmatpush1.bf16.msra.mxu0 0
        %1318 = vmatprep.subr.bf16.mxu0 0
        %1319 = vmatpush1.bf16.msra.mxu0 0
        %1320 = vmatprep.subr.bf16.mxu0 0
        %1321 = vmatpush1.bf16.msra.mxu0 0
        %1322 = vmatprep.subr.bf16.mxu0 0
        %1323 = vmatpush1.bf16.msra.mxu0 0
        %1324 = vmatprep.subr.bf16.mxu0 0
        %1325 = vmatpush1.bf16.msra.mxu0 0
        %1326 = vmatprep.subr.bf16.mxu0 0
        %1327 = vmatpush1.bf16.msra.mxu0 0
        %1328 = vmatprep.subr.bf16.mxu0 0
        %1329 = vmatpush1.bf16.msra.mxu0 0
        %1330 = vmatprep.subr.bf16.mxu0 0
        %1331 = vmatpush1.bf16.msra.mxu0 0
        %1332 = vmatprep.mubr.bf16.mxu0 0
        %1333 = vmatmul.mubr.bf16.gmra.mrb[0].mxu0 %v879
        %v1334 = vpop.f32.mrb[0].mxu0
        %v1335 = vadd.f32 0.0, %v1334
        %v1336 = vpop.f32.mrb[0].mxu0
        %v1337 = vpop.f32.mrb[0].mxu0
        %v1338 = vadd.f32 0.0, %v1337
        %v1339 = vpop.f32.mrb[0].mxu0
        %1340 = vmatprep.mubr.bf16.mxu0 0
        %1341 = vmatmul.mubr.bf16.gmra.mrb[0].mxu0 %v882
        %v1342 = vpop.f32.mrb[0].mxu0
        %v1343 = vadd.f32 0.0, %v1342
        %v1344 = vpop.f32.mrb[0].mxu0
        %v1345 = vpop.f32.mrb[0].mxu0
        %v1346 = vadd.f32 0.0, %v1345
        %v1347 = vpop.f32.mrb[0].mxu0
        %1348 = vmatprep.mubr.bf16.mxu0 0
        %1349 = vmatmul.mubr.bf16.gmra.mrb[0].mxu0 %v885
        %v1350 = vpop.f32.mrb[0].mxu0
        %v1351 = vadd.f32 0.0, %v1350
        %v1352 = vpop.f32.mrb[0].mxu0
        %v1353 = vpop.f32.mrb[0].mxu0
        %v1354 = vadd.f32 0.0, %v1353
        %v1355 = vpop.f32.mrb[0].mxu0
        %1356 = vmatprep.mubr.bf16.mxu0 0
        %1357 = vmatmul.mubr.bf16.gmra.mrb[0].mxu0 %v888
        %v1358 = vpop.f32.mrb[0].mxu0
        %v1359 = vadd.f32 0.0, %v1358
        %v1360 = vpop.f32.mrb[0].mxu0
        %v1361 = vpop.f32.mrb[0].mxu0
        %v1362 = vadd.f32 0.0, %v1361
        %v1363 = vpop.f32.mrb[0].mxu0
        %1364 = vdwg.mxu0
        %v1381 = vunpack.c.l.b16 %v1280
        %v1382 = vunpack.c.l.b16 %v1281
        %v1383 = vunpack.c.l.b16 %v1282
        %v1384 = vunpack.c.l.b16 %v1283
        %v1385 = vunpack.c.l.b16 %v1284
        %v1386 = vunpack.c.l.b16 %v1285
        %v1387 = vunpack.c.l.b16 %v1286
        %v1388 = vunpack.c.l.b16 %v1287
        %v1389 = vunpack.c.l.b16 %v1288
        %v1390 = vunpack.c.l.b16 %v1289
        %v1391 = vunpack.c.l.b16 %v1290
        %v1392 = vunpack.c.l.b16 %v1291
        %v1393 = vunpack.c.l.b16 %v1292
        %v1394 = vunpack.c.l.b16 %v1293
        %v1395 = vunpack.c.l.b16 %v1294
        %v1396 = vunpack.c.l.b16 %v1295
        %v1397 = vpack.c.b16 %v1382, %v1381
        %v1398 = vpack.c.b16 %v1384, %v1383
        %v1399 = vpack.c.b16 %v1386, %v1385
        %v1400 = vpack.c.b16 %v1388, %v1387
        %v1401 = vpack.c.b16 %v1390, %v1389
        %v1402 = vpack.c.b16 %v1392, %v1391
        %v1403 = vpack.c.b16 %v1394, %v1393
        %v1404 = vpack.c.b16 %v1396, %v1395
        %1413 = vmatprep.subr.bf16.mxu0 0
        %1414 = vmatpush1.bf16.msra.mxu0 %v1397
        %1415 = vmatprep.subr.bf16.mxu0 0
        %1416 = vmatpush1.bf16.msra.mxu0 %v1398
        %1417 = vmatprep.subr.bf16.mxu0 0
        %1418 = vmatpush1.bf16.msra.mxu0 %v1399
        %1419 = vmatprep.subr.bf16.mxu0 0
        %1420 = vmatpush1.bf16.msra.mxu0 %v1400
        %1421 = vmatprep.subr.bf16.mxu0 0
        %1422 = vmatpush1.bf16.msra.mxu0 %v1401
        %1423 = vmatprep.subr.bf16.mxu0 0
        %1424 = vmatpush1.bf16.msra.mxu0 %v1402
        %1425 = vmatprep.subr.bf16.mxu0 0
        %1426 = vmatpush1.bf16.msra.mxu0 %v1403
        %1427 = vmatprep.subr.bf16.mxu0 0
        %1428 = vmatpush1.bf16.msra.mxu0 %v1404
        %1429 = vmatprep.subr.bf16.mxu0 0
        %1430 = vmatpush1.bf16.msra.mxu0 0
        %1431 = vmatprep.subr.bf16.mxu0 0
        %1432 = vmatpush1.bf16.msra.mxu0 0
        %1433 = vmatprep.subr.bf16.mxu0 0
        %1434 = vmatpush1.bf16.msra.mxu0 0
        %1435 = vmatprep.subr.bf16.mxu0 0
        %1436 = vmatpush1.bf16.msra.mxu0 0
        %1437 = vmatprep.subr.bf16.mxu0 0
        %1438 = vmatpush1.bf16.msra.mxu0 0
        %1439 = vmatprep.subr.bf16.mxu0 0
        %1440 = vmatpush1.bf16.msra.mxu0 0
        %1441 = vmatprep.subr.bf16.mxu0 0
        %1442 = vmatpush1.bf16.msra.mxu0 0
        %1443 = vmatprep.subr.bf16.mxu0 0
        %1444 = vmatpush1.bf16.msra.mxu0 0
        %1445 = vmatprep.mubr.bf16.mxu0 0
        %1446 = vmatmul.mubr.bf16.gmra.mrb[0].mxu0 %v1221
        %v1447 = vpop.f32.mrb[0].mxu0
        %v1448 = vadd.f32 %v1335, %v1447
        %v1449 = vpop.f32.mrb[0].mxu0
        %v1450 = vpop.f32.mrb[0].mxu0
        %v1451 = vadd.f32 %v1338, %v1450
        %v1452 = vpop.f32.mrb[0].mxu0
        %1453 = vmatprep.mubr.bf16.mxu0 0
        %1454 = vmatmul.mubr.bf16.gmra.mrb[0].mxu0 %v1222
        %v1455 = vpop.f32.mrb[0].mxu0
        %v1456 = vadd.f32 %v1343, %v1455
        %v1457 = vpop.f32.mrb[0].mxu0
        %v1458 = vpop.f32.mrb[0].mxu0
        %v1459 = vadd.f32 %v1346, %v1458
        %v1460 = vpop.f32.mrb[0].mxu0
        %1461 = vmatprep.mubr.bf16.mxu0 0
        %1462 = vmatmul.mubr.bf16.gmra.mrb[0].mxu0 %v1223
        %v1463 = vpop.f32.mrb[0].mxu0
        %v1464 = vadd.f32 %v1351, %v1463
        %v1465 = vpop.f32.mrb[0].mxu0
        %v1466 = vpop.f32.mrb[0].mxu0
        %v1467 = vadd.f32 %v1354, %v1466
        %v1468 = vpop.f32.mrb[0].mxu0
        %1469 = vmatprep.mubr.bf16.mxu0 0
        %1470 = vmatmul.mubr.bf16.gmra.mrb[0].mxu0 %v1224
        %v1471 = vpop.f32.mrb[0].mxu0
        %v1472 = vadd.f32 %v1359, %v1471
        %v1473 = vpop.f32.mrb[0].mxu0
        %v1474 = vpop.f32.mrb[0].mxu0
        %v1475 = vadd.f32 %v1362, %v1474
        %v1476 = vpop.f32.mrb[0].mxu0
        %1477 = vdwg.mxu0
        %v1479 = vcombine.high %v1275, %v1275
        %v1481 = vunpack.c.l.s4 1966171168
        %v1482 = vunpack.c.0.s8 %v1481
        %v1483 = vlaneseq
        %v1484 = vshrl.u32 %v1483, 7
        %v1485 = vsub.s32 %v1482, %v1484
        %v1486 = vrot.slane %v1275, %v1485
        %v1488 = vunpack.c.l.s4 1966171168
        %v1489 = vunpack.c.0.s8 %v1488
        %v1490 = vlaneseq
        %v1491 = vshrl.u32 %v1490, 7
        %v1492 = vsub.s32 %v1489, %v1491
        %v1493 = vrot.slane %v1479, %v1492
        %v1494 = vcombine.high %v1486, %v1486
        %v1495 = vcombine.high %v1493, %v1493
        %v1497 = vunpack.c.l.s4 1966171168
        %v1498 = vunpack.c.0.s8 %v1497
        %v1499 = vlaneseq
        %v1500 = vshrl.u32 %v1499, 7
        %v1501 = vsub.s32 %v1498, %v1500
        %v1502 = vrot.slane %v1486, %v1501
        %v1504 = vunpack.c.l.s4 1966171168
        %v1505 = vunpack.c.0.s8 %v1504
        %v1506 = vlaneseq
        %v1507 = vshrl.u32 %v1506, 7
        %v1508 = vsub.s32 %v1505, %v1507
        %v1509 = vrot.slane %v1493, %v1508
        %v1511 = vunpack.c.l.s4 1966171168
        %v1512 = vunpack.c.0.s8 %v1511
        %v1513 = vlaneseq
        %v1514 = vshrl.u32 %v1513, 7
        %v1515 = vsub.s32 %v1512, %v1514
        %v1516 = vrot.slane %v1494, %v1515
        %v1518 = vunpack.c.l.s4 1966171168
        %v1519 = vunpack.c.0.s8 %v1518
        %v1520 = vlaneseq
        %v1521 = vshrl.u32 %v1520, 7
        %v1522 = vsub.s32 %v1519, %v1521
        %v1523 = vrot.slane %v1495, %v1522
        %v1524 = vcombine.high %v1502, %v1502
        %v1525 = vcombine.high %v1509, %v1509
        %v1526 = vcombine.high %v1516, %v1516
        %v1527 = vcombine.high %v1523, %v1523
        %v1528 = vlaneseq
        %v1529 = vshrl.u32 %v1528, 7
        %v1530 = vsub.s32 0, %v1529
        %v1531 = vrot.slane %v1502, %v1530
        %v1532 = vlaneseq
        %v1533 = vshrl.u32 %v1532, 7
        %v1534 = vsub.s32 0, %v1533
        %v1535 = vrot.slane %v1516, %v1534
        %v1536 = vlaneseq
        %v1537 = vshrl.u32 %v1536, 7
        %v1538 = vsub.s32 0, %v1537
        %v1539 = vrot.slane %v1524, %v1538
        %v1540 = vlaneseq
        %v1541 = vshrl.u32 %v1540, 7
        %v1542 = vsub.s32 0, %v1541
        %v1543 = vrot.slane %v1526, %v1542
        %v1544 = vlaneseq
        %v1545 = vshrl.u32 %v1544, 7
        %v1546 = vsub.s32 0, %v1545
        %v1547 = vrot.slane %v1509, %v1546
        %v1548 = vlaneseq
        %v1549 = vshrl.u32 %v1548, 7
        %v1550 = vsub.s32 0, %v1549
        %v1551 = vrot.slane %v1523, %v1550
        %v1552 = vlaneseq
        %v1553 = vshrl.u32 %v1552, 7
        %v1554 = vsub.s32 0, %v1553
        %v1555 = vrot.slane %v1525, %v1554
        %v1556 = vlaneseq
        %v1557 = vshrl.u32 %v1556, 7
        %v1558 = vsub.s32 0, %v1557
        %v1559 = vrot.slane %v1527, %v1558
        %v1568 = vadd.f32 %v1448, %v1531
        %v1569 = vadd.f32 %v1451, %v1535
        %v1570 = vadd.f32 %v1456, %v1539
        %v1571 = vadd.f32 %v1459, %v1543
        %v1572 = vadd.f32 %v1464, %v1547
        %v1573 = vadd.f32 %v1467, %v1551
        %v1574 = vadd.f32 %v1472, %v1555
        %v1575 = vadd.f32 %v1475, %v1559
        %v1576 = vadd.f32 %v1568, %v800
        %v1577 = vadd.f32 %v1569, %v800
        %v1578 = vadd.f32 %v1570, %v800
        %v1579 = vadd.f32 %v1571, %v800
        %v1580 = vadd.f32 %v1572, %v800
        %v1581 = vadd.f32 %v1573, %v800
        %v1582 = vadd.f32 %v1574, %v800
        %v1583 = vadd.f32 %v1575, %v800
        %1584 = vadd.xlane.f32.xlu0 %v1576
        %v1585 = vpop.xlane.xlu0 %1584
        %1586 = vadd.xlane.f32.xlu0 %v1577
        %v1587 = vpop.xlane.xlu0 %1586
        %1588 = vadd.xlane.f32.xlu0 %v1578
        %v1589 = vpop.xlane.xlu0 %1588
        %1590 = vadd.xlane.f32.xlu0 %v1579
        %v1591 = vpop.xlane.xlu0 %1590
        %1592 = vadd.xlane.f32.xlu0 %v1580
        %v1593 = vpop.xlane.xlu0 %1592
        %1594 = vadd.xlane.f32.xlu0 %v1581
        %v1595 = vpop.xlane.xlu0 %1594
        %1596 = vadd.xlane.f32.xlu0 %v1582
        %v1597 = vpop.xlane.xlu0 %1596
        %1598 = vadd.xlane.f32.xlu0 %v1583
        %v1599 = vpop.xlane.xlu0 %1598
        %v1600 = vmul.f32 %v1576, %v1576
        %v1601 = vmul.f32 %v1577, %v1577
        %v1602 = vmul.f32 %v1578, %v1578
        %v1603 = vmul.f32 %v1579, %v1579
        %v1604 = vmul.f32 %v1580, %v1580
        %v1605 = vmul.f32 %v1581, %v1581
        %v1606 = vmul.f32 %v1582, %v1582
        %v1607 = vmul.f32 %v1583, %v1583
        %1608 = vadd.xlane.f32.xlu0 %v1600
        %v1609 = vpop.xlane.xlu0 %1608
        %1610 = vadd.xlane.f32.xlu0 %v1601
        %v1611 = vpop.xlane.xlu0 %1610
        %1612 = vadd.xlane.f32.xlu0 %v1602
        %v1613 = vpop.xlane.xlu0 %1612
        %1614 = vadd.xlane.f32.xlu0 %v1603
        %v1615 = vpop.xlane.xlu0 %1614
        %1616 = vadd.xlane.f32.xlu0 %v1604
        %v1617 = vpop.xlane.xlu0 %1616
        %1618 = vadd.xlane.f32.xlu0 %v1605
        %v1619 = vpop.xlane.xlu0 %1618
        %1620 = vadd.xlane.f32.xlu0 %v1606
        %v1621 = vpop.xlane.xlu0 %1620
        %1622 = vadd.xlane.f32.xlu0 %v1607
        %v1623 = vpop.xlane.xlu0 %1622
        %v1624 = vmul.f32 %v1585, 0.0625
        %v1625 = vmul.f32 %v1587, 0.0625
        %v1626 = vmul.f32 %v1589, 0.0625
        %v1627 = vmul.f32 %v1591, 0.0625
        %v1628 = vmul.f32 %v1593, 0.0625
        %v1629 = vmul.f32 %v1595, 0.0625
        %v1630 = vmul.f32 %v1597, 0.0625
        %v1631 = vmul.f32 %v1599, 0.0625
        %v1632 = vmul.f32 %v1609, 0.0625
        %v1633 = vmul.f32 %v1611, 0.0625
        %v1634 = vmul.f32 %v1613, 0.0625
        %v1635 = vmul.f32 %v1615, 0.0625
        %v1636 = vmul.f32 %v1617, 0.0625
        %v1637 = vmul.f32 %v1619, 0.0625
        %v1638 = vmul.f32 %v1621, 0.0625
        %v1639 = vmul.f32 %v1623, 0.0625
        %v1640 = vmul.f32 %v1624, %v1624
        %v1641 = vmul.f32 %v1625, %v1625
        %v1642 = vmul.f32 %v1626, %v1626
        %v1643 = vmul.f32 %v1627, %v1627
        %v1644 = vmul.f32 %v1628, %v1628
        %v1645 = vmul.f32 %v1629, %v1629
        %v1646 = vmul.f32 %v1630, %v1630
        %v1647 = vmul.f32 %v1631, %v1631
        %v1648 = vsub.f32 %v1632, %v1640
        %v1649 = vsub.f32 %v1633, %v1641
        %v1650 = vsub.f32 %v1634, %v1642
        %v1651 = vsub.f32 %v1635, %v1643
        %v1652 = vsub.f32 %v1636, %v1644
        %v1653 = vsub.f32 %v1637, %v1645
        %v1654 = vsub.f32 %v1638, %v1646
        %v1655 = vsub.f32 %v1639, %v1647
        %v1656 = vmax.f32 %v1648, 0.0
        %v1657 = vmax.f32 %v1649, 0.0
        %v1658 = vmax.f32 %v1650, 0.0
        %v1659 = vmax.f32 %v1651, 0.0
        %v1660 = vmax.f32 %v1652, 0.0
        %v1661 = vmax.f32 %v1653, 0.0
        %v1662 = vmax.f32 %v1654, 0.0
        %v1663 = vmax.f32 %v1655, 0.0
        %v1664 = vsub.f32 %v1576, %v1624
        %v1665 = vsub.f32 %v1577, %v1625
        %v1666 = vsub.f32 %v1578, %v1626
        %v1667 = vsub.f32 %v1579, %v1627
        %v1668 = vsub.f32 %v1580, %v1628
        %v1669 = vsub.f32 %v1581, %v1629
        %v1670 = vsub.f32 %v1582, %v1630
        %v1671 = vsub.f32 %v1583, %v1631
        %v1672 = vadd.f32 %v1656, 1e-05
        %v1673 = vadd.f32 %v1657, 1e-05
        %v1674 = vadd.f32 %v1658, 1e-05
        %v1675 = vadd.f32 %v1659, 1e-05
        %v1676 = vadd.f32 %v1660, 1e-05
        %v1677 = vadd.f32 %v1661, 1e-05
        %v1678 = vadd.f32 %v1662, 1e-05
        %v1679 = vadd.f32 %v1663, 1e-05
        %v1680 = vrsqrt.pop %v1672
        %v1681 = vrsqrt.pop %v1673
        %v1682 = vrsqrt.pop %v1674
        %v1683 = vrsqrt.pop %v1675
        %v1684 = vrsqrt.pop %v1676
        %v1685 = vrsqrt.pop %v1677
        %v1686 = vrsqrt.pop %v1678
        %v1687 = vrsqrt.pop %v1679
        %v1688 = vmul.f32 %v1664, %v1680
        %v1689 = vmul.f32 %v1665, %v1681
        %v1690 = vmul.f32 %v1666, %v1682
        %v1691 = vmul.f32 %v1667, %v1683
        %v1692 = vmul.f32 %v1668, %v1684
        %v1693 = vmul.f32 %v1669, %v1685
        %v1694 = vmul.f32 %v1670, %v1686
        %v1695 = vmul.f32 %v1671, %v1687
        %v1696 = vld [vmem:[%s14] sm:$0x1]
        %v1698 = vlaneseq
        %v1699 = vshrl.u32 %v1698, 7
        %v1700 = vsub.s32 0, %v1699
        %v1701 = vrot.slane %v1696, %v1700
        %v1703 = vmul.f32 %v1688, %v1701
        %v1704 = vmul.f32 %v1689, %v1701
        %v1705 = vmul.f32 %v1690, %v1701
        %v1706 = vmul.f32 %v1691, %v1701
        %v1707 = vmul.f32 %v1692, %v1701
        %v1708 = vmul.f32 %v1693, %v1701
        %v1709 = vmul.f32 %v1694, %v1701
        %v1710 = vmul.f32 %v1695, %v1701
        %v1711 = vld [vmem:[%s15] sm:$0x1]
        %v1713 = vlaneseq
        %v1714 = vshrl.u32 %v1713, 7
        %v1715 = vsub.s32 0, %v1714
        %v1716 = vrot.slane %v1711, %v1715
        %v1718 = vadd.f32 %v1703, %v1716
        %v1719 = vadd.f32 %v1704, %v1716
        %v1720 = vadd.f32 %v1705, %v1716
        %v1721 = vadd.f32 %v1706, %v1716
        %v1722 = vadd.f32 %v1707, %v1716
        %v1723 = vadd.f32 %v1708, %v1716
        %v1724 = vadd.f32 %v1709, %v1716
        %v1725 = vadd.f32 %v1710, %v1716
        %1726 = vst [vmem:[%s700] sm:$0xff] %v1718
        %1727 = vst [vmem:[%s700 + $0x8] sm:$0xff] %v1719
        %1728 = vst [vmem:[%s700 + $0x10] sm:$0xff] %v1720
        %1729 = vst [vmem:[%s700 + $0x18] sm:$0xff] %v1721
        %1730 = vst [vmem:[%s700 + $0x20] sm:$0xff] %v1722
        %1731 = vst [vmem:[%s700 + $0x28] sm:$0xff] %v1723
        %1732 = vst [vmem:[%s700 + $0x30] sm:$0xff] %v1724
        %1733 = vst [vmem:[%s700 + $0x38] sm:$0xff] %v1725
        %s1734 = sand.u32 %s428, 1
        %s1735 = scalar_lea.sflag [#allocation4], %s1734
        %s1736 = sand.u32 %s428, 1
        %s1737 = smul.addr %s1736, 64
        %s1738 = scalar_lea.vmem [#allocation14], %s1737
        // Predicated region
        $region113: #{tpu_custom_call.1} parent=83 // pred_check
          %p1739 = pneg %p438
        $region114: #{tpu_custom_call.1} parent=83 // pred_check_branch
          %1741 = sbr.rel (%p1739) target = $region116
        $region115: #{tpu_custom_call.1} parent=83 // pred_region
          %s1742 = smul.u32 8, %s43
          %s1744 = ssub.s32 1024, 1024
          %1745 = vsyncadd %s1735, %s1744
          %s1746 = sadd.s32 %s44, %s1742
          %s1747 = smul.addr %s45, 8
          %s1748 = sadd.s32 %s1746, %s1747
          %s1749 = smul.addr %s1748, 128
          %s1750 = scalar_lea.hbm %s16, %s1749
          %s1751 = sshll.u32 %s1738, 4
          %s1752 = int_to_ptr.vmem [resolvable:$true] %s1751
          %1757 = dma.vmem_to_hbm [thread:$0]  %s1752, 1024, %s1750, %s1735, 128, 128, 8
        $region116: #{tpu_custom_call.1} parent=83 // pred_fallthru
          _
      $region84: #{tpu_custom_call.1} parent=5 // pred_fallthru
        _
      %p1758 = scmp.le.s32.totalorder 2, %s33
      // Predicated region
      $region117: #{tpu_custom_call.1} parent=5 // pred_check
        %p1759 = pneg %p1758
      $region118: #{tpu_custom_call.1} parent=5 // pred_check_branch
        %1761 = sbr.rel (%p1759) target = $region120
      $region119: #{tpu_custom_call.1} parent=5 // pred_region
        %s1762 = ssub.s32 %s33, 2
        // Predicated region
        $region121: #{tpu_custom_call.1} parent=119 // pred_check
          %p1763 = pneg %p444
        $region122: #{tpu_custom_call.1} parent=119 // pred_check_branch
          %1765 = sbr.rel (%p1763) target = $region124
        $region123: #{tpu_custom_call.1} parent=119 // pred_region
          %s1766 = sand.u32 %s429, 1
          %s1767 = scalar_lea.sflag [#allocation4], %s1766
          %s1768 = sand.u32 %s429, 1
          %s1769 = smul.addr %s1768, 64
          %s1770 = scalar_lea.vmem [#allocation14], %s1769
          %1771 = dma.done %s1767, 1024
        $region124: #{tpu_custom_call.1} parent=119 // pred_fallthru
          _
      $region120: #{tpu_custom_call.1} parent=5 // pred_fallthru
        _
    $region6: #{tpu_custom_call.1} parent=1 // loop_footer
      %s37 = sadd.s32 1, %s33
    $region7: #{tpu_custom_call.1} parent=1 // loop_footer_branch
      %32 = sbr.rel target = $region3
    $region8: #{tpu_custom_call.1} parent=1 // loop_exit
      _
    %1772 = vsyncpa [#allocation3], 1
    %s1773 = scalar_lea.sflag [#allocation3], 1
    %1774 = vsyncpa %s1773, 1
    %1775 = vsyncpa [#allocation6], 1
    %s1776 = scalar_lea.sflag [#allocation6], 1
    %1777 = vsyncpa %s1776, 1
    %1778 = vsyncpa [#allocation9], 1
    %1779 = vsyncpa [#allocation12], 1
    %1780 = vsyncpa [#allocation4], 1
    %s1781 = scalar_lea.sflag [#allocation4], 1
    %1782 = vsyncpa %s1781, 1

</llo_original>
